<compile_context>
chip_gen: v7x
topology: tpu7x:2x2x1
jax: 0.10.0
libtpu: 0.0.40
codegen_flags: <defaults>
</compile_context>

<pallas_src>
import functools

import jax
import jax.numpy as jnp
from jax import lax
from jax.experimental import pallas as pl
from jax.experimental.pallas import tpu as pltpu


def _log_sigmoid(x):
    # log(sigmoid(x)) = min(x, 0) - log(1 + exp(-|x|))   (numerically stable)
    return jnp.minimum(x, 0.0) - jnp.log(1.0 + jnp.exp(-jnp.abs(x)))


def _gelu_exact(x):
    # Exact GELU (erf form) -- matches PyTorch F.gelu default.
    return 0.5 * x * (1.0 + lax.erf(x * 0.7071067811865476))


# --------------------------------------------------------------------------- #
# Single fused kernel: LN1 + sLSTM core + head-wise LN + residual + LN2 + FFN
# --------------------------------------------------------------------------- #
def _slstm_block_kernel(x_ref, ln1w_ref, ln1b_ref, w_in_ref, b_in_ref,
                        whh_ref, havg_ref, hnw_ref, hnb_ref, ln2w_ref,
                        ln2b_ref, w1t_ref, b1_ref, w2t_ref, b2_ref,
                        out_ref, proj_ref, hseq_ref, *, seq_len, batch):
    L = seq_len
    B = batch
    D = x_ref.shape[1]                         # d_model (heads on lanes)
    dff = w2t_ref.shape[0]

    # ---- LN1 over all L*B rows at once (rows are time-major: row = t*B + b) ----
    x = x_ref[...]                                                     # (L*B, D)
    mu = jnp.mean(x, axis=-1, keepdims=True)
    var = jnp.mean(jnp.square(x - mu), axis=-1, keepdims=True)
    xn = (x - mu) * lax.rsqrt(var + 1e-5) * ln1w_ref[...] + ln1b_ref[...]

    # ---- whole-sequence input projection: ONE block-diagonal matmul.
    #      Columns are gate-major, then head, then dph -> gate g for all heads
    #      occupies the contiguous lane slice [g*D:(g+1)*D]. ----
    proj_ref[...] = (jnp.dot(xn, w_in_ref[...],
                             preferred_element_type=jnp.float32) + b_in_ref[...])

    # ---- serial stabilized sLSTM recurrence (heads batched on the lane axis) ----
    whh = whh_ref[...]                                                 # (D, 4*D)

    def step(t, carry):
        h, c, n, m = carry
        row = pl.multiple_of(t * B, B)
        pt = proj_ref[pl.ds(row, B), :]                                # (B, 4*D)
        g_all = pt + jnp.dot(h, whh, preferred_element_type=jnp.float32)
        i_g = g_all[:, :D]
        f_g = g_all[:, D:2 * D]
        z_g = jnp.tanh(g_all[:, 2 * D:3 * D])
        o_g = jax.nn.sigmoid(g_all[:, 3 * D:])

        logf = _log_sigmoid(f_g) + m
        m_new = jnp.maximum(logf, i_g)
        i_e = jnp.exp(i_g - m_new)
        f_e = jnp.exp(logf - m_new)
        c_new = f_e * c + i_e * z_g
        n_new = f_e * n + i_e
        h_new = o_g * (c_new / n_new)          # exact division (n_new >= i_e > 0)

        # Only the carry update + one store stay on the serial chain.
        hseq_ref[pl.ds(row, B), :] = h_new
        return h_new, c_new, n_new, m_new

    # m starts at a huge finite negative value -> reproduces the reference
    # "m = i at t = 0" semantics exactly for the zero initial state.
    z0 = jnp.zeros((B, D), jnp.float32)
    init = (z0, z0, z0, jnp.full((B, D), -1e30, jnp.float32))
    lax.fori_loop(0, L, step, init, unroll=True if L <= 32 else 8)

    # ---- vectorized epilogue (hoisted off the serial chain) ----
    # Head-wise LayerNorm via a block-diagonal averaging matmul: heads never
    # leave the lane axis, no reshapes / cross-lane shuffles.
    hseq = hseq_ref[...]                                               # (L*B, D)
    havg = havg_ref[...]                                               # (D, D)
    mu_h = jnp.dot(hseq, havg, preferred_element_type=jnp.float32)
    dcen = hseq - mu_h
    var_h = jnp.dot(dcen * dcen, havg, preferred_element_type=jnp.float32)
    hn = dcen * lax.rsqrt(var_h + 1e-5) * hnw_ref[...] + hnb_ref[...]
    y = hn + x                                                         # residual 1

    # LN2 + gated FeedForward (single lane-dense (D, 2*dff) matmul) + residual 2
    mu2 = jnp.mean(y, axis=-1, keepdims=True)
    var2 = jnp.mean(jnp.square(y - mu2), axis=-1, keepdims=True)
    yn = (y - mu2) * lax.rsqrt(var2 + 1e-5) * ln2w_ref[...] + ln2b_ref[...]
    pre = jnp.dot(yn, w1t_ref[...], preferred_element_type=jnp.float32) + b1_ref[...]
    x1 = pre[:, :dff]
    x2 = pre[:, dff:]
    ffn = jnp.dot(x1 * _gelu_exact(x2), w2t_ref[...],
                  preferred_element_type=jnp.float32) + b2_ref[...]
    out_ref[...] = ffn + y


def _full2d(shape):
    return pl.BlockSpec(shape, lambda i: (0, 0))


# --------------------------------------------------------------------------- #
# Public wrapper (whole sLSTMBlock forward)
# --------------------------------------------------------------------------- #
@functools.partial(jax.jit, static_argnames=("nhead",))
def slstm_block_forward(x, ln1_w, ln1_b, w_ih, b_ih, w_hh, hn_w, hn_b,
                        ln2_w, ln2_b, w1, b1, w2, b2, *, nhead):
    """x: (B, L, d_model) f32 -> output (B, L, d_model) f32 (hidden=None, eval)."""
    B, L, D = x.shape
    dph = D // nhead
    dff = w2.shape[1]
    f32 = jnp.float32
    R = L * B

    # ---- one-time parameter packing (tiny; exact broadcast-multiplies only) ----
    eye_h = jnp.eye(nhead, dtype=f32)
    blk = eye_h[:, None, None, :, None]                                # [h,1,1,m,1]
    # block-diagonal input projection: rows (head, dph_in), cols (gate, head, dph_out)
    w4 = w_ih.astype(f32).reshape(nhead, dph, 4, dph)                  # [h, j, g, k]
    w_in = (w4[:, :, :, None, :] * blk).reshape(D, 4 * D)
    b_in = jnp.transpose(b_ih.astype(f32).reshape(nhead, 4, dph),
                         (1, 0, 2)).reshape(1, 4 * D)
    # block-diagonal shared recurrent weight (same column order as w_in)
    whh_t = jnp.transpose(w_hh.astype(f32)).reshape(dph, 4, dph)       # [j, g, k]
    whh_blk = (whh_t[None, :, :, None, :] * blk).reshape(D, 4 * D)
    # block-diagonal per-head averaging matrix for the head-wise LayerNorm
    havg = jnp.kron(eye_h, jnp.full((dph, dph), 1.0 / dph, f32))       # (D, D)

    ln1w = ln1_w.astype(f32).reshape(1, D)
    ln1b = ln1_b.astype(f32).reshape(1, D)
    hnw_t = jnp.tile(hn_w.astype(f32), nhead).reshape(1, D)
    hnb_t = jnp.tile(hn_b.astype(f32), nhead).reshape(1, D)
    ln2w = ln2_w.astype(f32).reshape(1, D)
    ln2b = ln2_b.astype(f32).reshape(1, D)
    w1t = jnp.transpose(w1.astype(f32))                                # (D, 2*dff)
    b1r = b1.astype(f32).reshape(1, 2 * dff)
    w2t = jnp.transpose(w2.astype(f32))                                # (dff, D)
    b2r = b2.astype(f32).reshape(1, D)

    # time-major rows (row = t*B + b); cheap XLA transpose outside the kernel
    x2d = jnp.transpose(x, (1, 0, 2)).reshape(R, D).astype(f32)

    kernel = functools.partial(_slstm_block_kernel, seq_len=L, batch=B)
    out2d = pl.pallas_call(
        kernel,
        out_shape=jax.ShapeDtypeStruct((R, D), jnp.float32),
        grid=(1,),
        in_specs=[
            _full2d((R, D)),          # x (time-major rows)
            _full2d((1, D)),          # ln1 weight
            _full2d((1, D)),          # ln1 bias
            _full2d((D, 4 * D)),      # block-diag input projection
            _full2d((1, 4 * D)),      # projection bias
            _full2d((D, 4 * D)),      # block-diag recurrent weight
            _full2d((D, D)),          # head-averaging matrix
            _full2d((1, D)),          # head-wise norm weight (tiled)
            _full2d((1, D)),          # head-wise norm bias (tiled)
            _full2d((1, D)),          # ln2 weight
            _full2d((1, D)),          # ln2 bias
            _full2d((D, 2 * dff)),    # FFN linear1 weight^T
            _full2d((1, 2 * dff)),    # FFN linear1 bias
            _full2d((dff, D)),        # FFN linear2 weight^T
            _full2d((1, D)),          # FFN linear2 bias
        ],
        out_specs=_full2d((R, D)),
        scratch_shapes=[
            pltpu.VMEM((R, 4 * D), jnp.float32),   # whole-sequence gate projection
            pltpu.VMEM((R, D), jnp.float32),       # per-step hidden states
        ],
        compiler_params=pltpu.CompilerParams(
            dimension_semantics=("arbitrary",),
            vmem_limit_bytes=48 * 1024 * 1024),
    )(x2d, ln1w, ln1b, w_in, b_in, whh_blk, havg, hnw_t, hnb_t,
      ln2w, ln2b, w1t, b1r, w2t, b2r)

    return jnp.transpose(out2d.reshape(L, B, D), (1, 0, 2))


# --------------------------------------------------------------------------- #
# Pure-JAX f32 reference (mirrors the PyTorch forward)
# --------------------------------------------------------------------------- #
def reference_block(x, ln1_w, ln1_b, w_ih, b_ih, w_hh, hn_w, hn_b,
                    ln2_w, ln2_b, w1, b1, w2, b2, *, nhead):
    B, L, D = x.shape
    dph = D // nhead
    dff = w2.shape[1]

    def ln(v, w, b, eps=1e-5):
        mu = jnp.mean(v, axis=-1, keepdims=True)
        var = jnp.mean(jnp.square(v - mu), axis=-1, keepdims=True)
        return (v - mu) / jnp.sqrt(var + eps) * w + b

    xn = ln(x, ln1_w, ln1_b)
    xh = xn.reshape(B, L, nhead, dph)
    proj = jnp.einsum("blhj,hjk->blhk", xh, w_ih) + b_ih[None, None]   # (B,L,h,4*dph)

    h = jnp.zeros((B, nhead, dph), jnp.float32)
    c = jnp.zeros_like(h)
    n = jnp.zeros_like(h)
    m = None
    outs = []
    for t in range(L):
        p = proj[:, t] + jnp.einsum("bhj,kj->bhk", h, w_hh)            # linear_hh(h)
        i_g, f_g, z_g, o_g = jnp.split(p, 4, axis=-1)
        z_g = jnp.tanh(z_g)
        o_g = jax.nn.sigmoid(o_g)
        f_l = _log_sigmoid(f_g) + (m if m is not None else 0.0)
        m = jnp.maximum(f_l, i_g) if m is not None else i_g
        i_e = jnp.exp(i_g - m)
        f_e = jnp.exp(f_l - m)
        c = f_e * c + i_e * z_g
        n = f_e * n + i_e
        h = o_g * (c / n)
        outs.append(h)
    o = jnp.stack(outs, axis=1)                                        # (B,L,h,dph)
    o = ln(o, hn_w, hn_b)
    y = o.reshape(B, L, D) + x

    yn = ln(y, ln2_w, ln2_b)
    pre = jnp.matmul(yn, jnp.transpose(w1)) + b1
    x1 = pre[..., :dff]
    x2 = pre[..., dff:]
    out = jnp.matmul(x1 * _gelu_exact(x2), jnp.transpose(w2)) + b2
    return out + y


if __name__ == "__main__":
    # Small shapes consistent with the module: batch=2, seq=8, d_model=32,
    # nhead=4 (dph=8), dim_feedforward=64; eval-mode dropout, hidden=None.
    B, L, d_model, nhead = 2, 8, 32, 4
    dim_ff = 64
    dph = d_model // nhead

    key = jax.random.PRNGKey(0)
    ks = jax.random.split(key, 12)

    x = jax.random.normal(ks[0], (B, L, d_model), jnp.float32)

    # sLSTMCore parameters (per-head input projection + shared recurrent weight)
    w_ih = jax.random.normal(ks[1], (nhead, dph, 4 * dph), jnp.float32) / jnp.sqrt(
        jnp.float32(dph))
    # _init_forget_bias: linspace(3, 6, d_model) placed into the forget-gate slot
    fbias = jnp.linspace(3.0, 6.0, d_model, dtype=jnp.float32).reshape(nhead, 1, dph)
    b_ih = jnp.concatenate(
        [jnp.zeros((nhead, 1, dph), jnp.float32), fbias,
         jnp.zeros((nhead, 2, dph), jnp.float32)], axis=1).reshape(nhead, 4 * dph)
    w_hh = jax.random.normal(ks[2], (4 * dph, dph), jnp.float32) / jnp.sqrt(
        jnp.float32(dph))
    hn_w = 1.0 + 0.1 * jax.random.normal(ks[3], (dph,), jnp.float32)
    hn_b = 0.1 * jax.random.normal(ks[4], (dph,), jnp.float32)
    ln1_w = 1.0 + 0.1 * jax.random.normal(ks[5], (d_model,), jnp.float32)
    ln1_b = 0.1 * jax.random.normal(ks[6], (d_model,), jnp.float32)
    ln2_w = 1.0 + 0.1 * jax.random.normal(ks[7], (d_model,), jnp.float32)
    ln2_b = 0.1 * jax.random.normal(ks[8], (d_model,), jnp.float32)
    # FeedForward parameters (torch Linear convention: weight = (out, in))
    w1 = jax.random.normal(ks[9], (2 * dim_ff, d_model), jnp.float32) / jnp.sqrt(
        jnp.float32(d_model))
    b1 = 0.1 * jax.random.normal(ks[10], (2 * dim_ff,), jnp.float32)
    w2 = jax.random.normal(ks[11], (d_model, dim_ff), jnp.float32) / jnp.sqrt(
        jnp.float32(dim_ff))
    b2 = jnp.zeros((d_model,), jnp.float32)

    args = (x, ln1_w, ln1_b, w_ih, b_ih, w_hh, hn_w, hn_b,
            ln2_w, ln2_b, w1, b1, w2, b2)

    out = slstm_block_forward(*args, nhead=nhead)
    out = jax.block_until_ready(out)

    with jax.default_matmul_precision("float32"):
        ref = reference_block(*args, nhead=nhead)
    ref = jax.block_until_ready(ref)

    assert out.shape == (B, L, d_model)
    max_err = float(jnp.max(jnp.abs(out - ref)))
    assert jnp.allclose(out, ref, atol=5e-3, rtol=5e-3), f"max abs err {max_err}"

    print("KERNEL_OK")
</pallas_src>

<mosaic_0001>
module attributes {stable_mosaic.version = 11 : i64} {
  func.func @_slstm_block_kernel(%arg0: i32, %arg1: memref<16x32xf32, #tpu.memory_space<vmem>>, %arg2: memref<1x32xf32, #tpu.memory_space<vmem>>, %arg3: memref<1x32xf32, #tpu.memory_space<vmem>>, %arg4: memref<32x128xf32, #tpu.memory_space<vmem>>, %arg5: memref<1x128xf32, #tpu.memory_space<vmem>>, %arg6: memref<32x128xf32, #tpu.memory_space<vmem>>, %arg7: memref<32x32xf32, #tpu.memory_space<vmem>>, %arg8: memref<1x32xf32, #tpu.memory_space<vmem>>, %arg9: memref<1x32xf32, #tpu.memory_space<vmem>>, %arg10: memref<1x32xf32, #tpu.memory_space<vmem>>, %arg11: memref<1x32xf32, #tpu.memory_space<vmem>>, %arg12: memref<32x128xf32, #tpu.memory_space<vmem>>, %arg13: memref<1x128xf32, #tpu.memory_space<vmem>>, %arg14: memref<64x32xf32, #tpu.memory_space<vmem>>, %arg15: memref<1x32xf32, #tpu.memory_space<vmem>>, %arg16: memref<16x32xf32, #tpu.memory_space<vmem>>, %arg17: memref<16x128xf32, #tpu.memory_space<vmem>>, %arg18: memref<16x32xf32, #tpu.memory_space<vmem>>) attributes {dimension_semantics = [#tpu.dimension_semantics<arbitrary>], iteration_bounds = array<i64: 1>, scalar_prefetch = 0 : i64, scratch_operands = 2 : i64, tpu.core_type = #tpu.core_type<tc>, window_params = [{pipeline_mode = #tpu.pipeline_mode<synchronous>, transform_indices = @transform_0, window_bounds = array<i64: 16, 32>}, {pipeline_mode = #tpu.pipeline_mode<synchronous>, transform_indices = @transform_1, window_bounds = array<i64: 1, 32>}, {pipeline_mode = #tpu.pipeline_mode<synchronous>, transform_indices = @transform_2, window_bounds = array<i64: 1, 32>}, {pipeline_mode = #tpu.pipeline_mode<synchronous>, transform_indices = @transform_3, window_bounds = array<i64: 32, 128>}, {pipeline_mode = #tpu.pipeline_mode<synchronous>, transform_indices = @transform_4, window_bounds = array<i64: 1, 128>}, {pipeline_mode = #tpu.pipeline_mode<synchronous>, transform_indices = @transform_5, window_bounds = array<i64: 32, 128>}, {pipeline_mode = #tpu.pipeline_mode<synchronous>, transform_indices = @transform_6, window_bounds = array<i64: 32, 32>}, {pipeline_mode = #tpu.pipeline_mode<synchronous>, transform_indices = @transform_7, window_bounds = array<i64: 1, 32>}, {pipeline_mode = #tpu.pipeline_mode<synchronous>, transform_indices = @transform_8, window_bounds = array<i64: 1, 32>}, {pipeline_mode = #tpu.pipeline_mode<synchronous>, transform_indices = @transform_9, window_bounds = array<i64: 1, 32>}, {pipeline_mode = #tpu.pipeline_mode<synchronous>, transform_indices = @transform_10, window_bounds = array<i64: 1, 32>}, {pipeline_mode = #tpu.pipeline_mode<synchronous>, transform_indices = @transform_11, window_bounds = array<i64: 32, 128>}, {pipeline_mode = #tpu.pipeline_mode<synchronous>, transform_indices = @transform_12, window_bounds = array<i64: 1, 128>}, {pipeline_mode = #tpu.pipeline_mode<synchronous>, transform_indices = @transform_13, window_bounds = array<i64: 64, 32>}, {pipeline_mode = #tpu.pipeline_mode<synchronous>, transform_indices = @transform_14, window_bounds = array<i64: 1, 32>}, {pipeline_mode = #tpu.pipeline_mode<synchronous>, transform_indices = @transform_15, window_bounds = array<i64: 16, 32>}]} {
    %c0 = arith.constant 0 : index
    %c0_0 = arith.constant 0 : index
    %0 = vector.load %arg1[%c0, %c0_0] : memref<16x32xf32, #tpu.memory_space<vmem>>, vector<16x32xf32>
    %cst = arith.constant dense<0.000000e+00> : vector<16xf32>
    %1 = vector.multi_reduction <add>, %0, %cst [1] : vector<16x32xf32> to vector<16xf32>
    %2 = vector.shape_cast %1 : vector<16xf32> to vector<16x1xf32>
    %cst_1 = arith.constant 3.200000e+01 : f32
    %3 = vector.broadcast %cst_1 : f32 to vector<16x1xf32>
    %4 = arith.divf %2, %3 : vector<16x1xf32>
    %5 = vector.broadcast %4 : vector<16x1xf32> to vector<16x32xf32>
    %6 = arith.subf %0, %5 : vector<16x32xf32>
    %7 = arith.mulf %6, %6 : vector<16x32xf32>
    %cst_2 = arith.constant dense<0.000000e+00> : vector<16xf32>
    %8 = vector.multi_reduction <add>, %7, %cst_2 [1] : vector<16x32xf32> to vector<16xf32>
    %9 = vector.shape_cast %8 : vector<16xf32> to vector<16x1xf32>
    %cst_3 = arith.constant 3.200000e+01 : f32
    %10 = vector.broadcast %cst_3 : f32 to vector<16x1xf32>
    %11 = arith.divf %9, %10 : vector<16x1xf32>
    %12 = vector.broadcast %4 : vector<16x1xf32> to vector<16x32xf32>
    %13 = arith.subf %0, %12 : vector<16x32xf32>
    %cst_4 = arith.constant 9.99999974E-6 : f32
    %14 = vector.broadcast %cst_4 : f32 to vector<16x1xf32>
    %15 = arith.addf %11, %14 : vector<16x1xf32>
    %16 = math.rsqrt %15 : vector<16x1xf32>
    %17 = vector.broadcast %16 : vector<16x1xf32> to vector<16x32xf32>
    %18 = arith.mulf %13, %17 : vector<16x32xf32>
    %c0_5 = arith.constant 0 : index
    %c0_6 = arith.constant 0 : index
    %19 = vector.load %arg2[%c0_5, %c0_6] : memref<1x32xf32, #tpu.memory_space<vmem>>, vector<1x32xf32>
    %20 = vector.broadcast %19 : vector<1x32xf32> to vector<16x32xf32>
    %21 = arith.mulf %18, %20 : vector<16x32xf32>
    %c0_7 = arith.constant 0 : index
    %c0_8 = arith.constant 0 : index
    %22 = vector.load %arg3[%c0_7, %c0_8] : memref<1x32xf32, #tpu.memory_space<vmem>>, vector<1x32xf32>
    %23 = vector.broadcast %22 : vector<1x32xf32> to vector<16x32xf32>
    %24 = arith.addf %21, %23 : vector<16x32xf32>
    %c0_9 = arith.constant 0 : index
    %c0_10 = arith.constant 0 : index
    %25 = vector.load %arg4[%c0_9, %c0_10] : memref<32x128xf32, #tpu.memory_space<vmem>>, vector<32x128xf32>
    %cst_11 = arith.constant dense<0.000000e+00> : vector<16x128xf32>
    %26 = tpu.matmul %24, %25, %cst_11 {dimension_numbers = #tpu.dot_dimension_numbers<[1], [0], [0], [1], [0, 0, 1, 1], [], []>} : vector<16x32xf32>, vector<32x128xf32>, vector<16x128xf32> -> vector<16x128xf32>
    %c0_12 = arith.constant 0 : index
    %c0_13 = arith.constant 0 : index
    %27 = vector.load %arg5[%c0_12, %c0_13] : memref<1x128xf32, #tpu.memory_space<vmem>>, vector<1x128xf32>
    %28 = vector.broadcast %27 : vector<1x128xf32> to vector<16x128xf32>
    %29 = arith.addf %26, %28 : vector<16x128xf32>
    %c0_14 = arith.constant 0 : index
    %c0_15 = arith.constant 0 : index
    %30 = vector.load %arg17[%c0_14, %c0_15] : memref<16x128xf32, #tpu.memory_space<vmem>>, vector<16x128xf32>
    tpu.vector_store %arg17[%c0_14, %c0_15], %29 {strides = array<i32>} : memref<16x128xf32, #tpu.memory_space<vmem>>, vector<16x128xf32>,
    %c0_16 = arith.constant 0 : index
    %c0_17 = arith.constant 0 : index
    %31 = vector.load %arg6[%c0_16, %c0_17] : memref<32x128xf32, #tpu.memory_space<vmem>>, vector<32x128xf32>
    %cst_18 = arith.constant 0.000000e+00 : f32
    %32 = vector.broadcast %cst_18 : f32 to vector<2x32xf32>
    %cst_19 = arith.constant -1.000000e+30 : f32
    %33 = vector.broadcast %cst_19 : f32 to vector<2x32xf32>
    %c0_i32 = arith.constant 0 : i32
    %c2_i32 = arith.constant 2 : i32
    %34 = arith.muli %c0_i32, %c2_i32 : i32
    %35 = tpu.assume_multiple %34, 2 : i32
    %36 = arith.index_cast %35 : i32 to index
    %c0_20 = arith.constant 0 : index
    %37 = vector.load %arg17[%36, %c0_20] : memref<16x128xf32, #tpu.memory_space<vmem>>, vector<2x128xf32>
    %cst_21 = arith.constant dense<0.000000e+00> : vector<2x128xf32>
    %38 = tpu.matmul %32, %31, %cst_21 {dimension_numbers = #tpu.dot_dimension_numbers<[1], [0], [0], [1], [0, 0, 1, 1], [], []>} : vector<2x32xf32>, vector<32x128xf32>, vector<2x128xf32> -> vector<2x128xf32>
    %39 = arith.addf %37, %38 : vector<2x128xf32>
    %40 = vector.extract_strided_slice %39 {offsets = [0, 0], sizes = [2, 32], strides = [1, 1]} : vector<2x128xf32> to vector<2x32xf32>
    %41 = vector.extract_strided_slice %39 {offsets = [0, 32], sizes = [2, 32], strides = [1, 1]} : vector<2x128xf32> to vector<2x32xf32>
    %42 = vector.extract_strided_slice %39 {offsets = [0, 64], sizes = [2, 32], strides = [1, 1]} : vector<2x128xf32> to vector<2x32xf32>
    %43 = math.tanh %42 : vector<2x32xf32>
    %44 = vector.extract_strided_slice %39 {offsets = [0, 96], sizes = [2, 32], strides = [1, 1]} : vector<2x128xf32> to vector<2x32xf32>
    %45 = arith.negf %44 : vector<2x32xf32>
    %46 = math.exp %45 : vector<2x32xf32>
    %cst_22 = arith.constant 1.000000e+00 : f32
    %47 = vector.broadcast %cst_22 : f32 to vector<2x32xf32>
    %48 = arith.addf %47, %46 : vector<2x32xf32>
    %49 = arith.divf %47, %48 : vector<2x32xf32>
    %cst_23 = arith.constant 0.000000e+00 : f32
    %50 = vector.broadcast %cst_23 : f32 to vector<2x32xf32>
    %51 = arith.minimumf %41, %50 : vector<2x32xf32>
    %52 = math.absf %41 : vector<2x32xf32>
    %cst_24 = arith.constant 0.000000e+00 : f32
    %53 = vector.broadcast %cst_24 : f32 to vector<2x32xf32>
    %54 = arith.subf %53, %52 : vector<2x32xf32>
    %55 = math.exp %54 : vector<2x32xf32>
    %cst_25 = arith.constant 1.000000e+00 : f32
    %56 = vector.broadcast %cst_25 : f32 to vector<2x32xf32>
    %57 = arith.addf %56, %55 : vector<2x32xf32>
    %58 = math.log %57 : vector<2x32xf32>
    %59 = arith.subf %51, %58 : vector<2x32xf32>
    %60 = arith.addf %59, %33 : vector<2x32xf32>
    %61 = arith.maximumf %60, %40 : vector<2x32xf32>
    %62 = arith.subf %40, %61 : vector<2x32xf32>
    %63 = math.exp %62 : vector<2x32xf32>
    %64 = arith.subf %60, %61 : vector<2x32xf32>
    %65 = math.exp %64 : vector<2x32xf32>
    %66 = arith.mulf %65, %32 : vector<2x32xf32>
    %67 = arith.mulf %63, %43 : vector<2x32xf32>
    %68 = arith.addf %66, %67 : vector<2x32xf32>
    %69 = arith.mulf %65, %32 : vector<2x32xf32>
    %70 = arith.addf %69, %63 : vector<2x32xf32>
    %71 = arith.divf %68, %70 : vector<2x32xf32>
    %72 = arith.mulf %49, %71 : vector<2x32xf32>
    %73 = arith.index_cast %35 : i32 to index
    %c0_26 = arith.constant 0 : index
    %74 = vector.load %arg18[%73, %c0_26] : memref<16x32xf32, #tpu.memory_space<vmem>>, vector<2x32xf32>
    tpu.vector_store %arg18[%73, %c0_26], %72 {strides = array<i32>} : memref<16x32xf32, #tpu.memory_space<vmem>>, vector<2x32xf32>,
    %c1_i32 = arith.constant 1 : i32
    %c2_i32_27 = arith.constant 2 : i32
    %75 = arith.muli %c1_i32, %c2_i32_27 : i32
    %76 = tpu.assume_multiple %75, 2 : i32
    %77 = arith.index_cast %76 : i32 to index
    %c0_28 = arith.constant 0 : index
    %78 = vector.load %arg17[%77, %c0_28] : memref<16x128xf32, #tpu.memory_space<vmem>>, vector<2x128xf32>
    %cst_29 = arith.constant dense<0.000000e+00> : vector<2x128xf32>
    %79 = tpu.matmul %72, %31, %cst_29 {dimension_numbers = #tpu.dot_dimension_numbers<[1], [0], [0], [1], [0, 0, 1, 1], [], []>} : vector<2x32xf32>, vector<32x128xf32>, vector<2x128xf32> -> vector<2x128xf32>
    %80 = arith.addf %78, %79 : vector<2x128xf32>
    %81 = vector.extract_strided_slice %80 {offsets = [0, 0], sizes = [2, 32], strides = [1, 1]} : vector<2x128xf32> to vector<2x32xf32>
    %82 = vector.extract_strided_slice %80 {offsets = [0, 32], sizes = [2, 32], strides = [1, 1]} : vector<2x128xf32> to vector<2x32xf32>
    %83 = vector.extract_strided_slice %80 {offsets = [0, 64], sizes = [2, 32], strides = [1, 1]} : vector<2x128xf32> to vector<2x32xf32>
    %84 = math.tanh %83 : vector<2x32xf32>
    %85 = vector.extract_strided_slice %80 {offsets = [0, 96], sizes = [2, 32], strides = [1, 1]} : vector<2x128xf32> to vector<2x32xf32>
    %86 = arith.negf %85 : vector<2x32xf32>
    %87 = math.exp %86 : vector<2x32xf32>
    %cst_30 = arith.constant 1.000000e+00 : f32
    %88 = vector.broadcast %cst_30 : f32 to vector<2x32xf32>
    %89 = arith.addf %88, %87 : vector<2x32xf32>
    %90 = arith.divf %88, %89 : vector<2x32xf32>
    %cst_31 = arith.constant 0.000000e+00 : f32
    %91 = vector.broadcast %cst_31 : f32 to vector<2x32xf32>
    %92 = arith.minimumf %82, %91 : vector<2x32xf32>
    %93 = math.absf %82 : vector<2x32xf32>
    %cst_32 = arith.constant 0.000000e+00 : f32
    %94 = vector.broadcast %cst_32 : f32 to vector<2x32xf32>
    %95 = arith.subf %94, %93 : vector<2x32xf32>
    %96 = math.exp %95 : vector<2x32xf32>
    %cst_33 = arith.constant 1.000000e+00 : f32
    %97 = vector.broadcast %cst_33 : f32 to vector<2x32xf32>
    %98 = arith.addf %97, %96 : vector<2x32xf32>
    %99 = math.log %98 : vector<2x32xf32>
    %100 = arith.subf %92, %99 : vector<2x32xf32>
    %101 = arith.addf %100, %61 : vector<2x32xf32>
    %102 = arith.maximumf %101, %81 : vector<2x32xf32>
    %103 = arith.subf %81, %102 : vector<2x32xf32>
    %104 = math.exp %103 : vector<2x32xf32>
    %105 = arith.subf %101, %102 : vector<2x32xf32>
    %106 = math.exp %105 : vector<2x32xf32>
    %107 = arith.mulf %106, %68 : vector<2x32xf32>
    %108 = arith.mulf %104, %84 : vector<2x32xf32>
    %109 = arith.addf %107, %108 : vector<2x32xf32>
    %110 = arith.mulf %106, %70 : vector<2x32xf32>
    %111 = arith.addf %110, %104 : vector<2x32xf32>
    %112 = arith.divf %109, %111 : vector<2x32xf32>
    %113 = arith.mulf %90, %112 : vector<2x32xf32>
    %114 = arith.index_cast %76 : i32 to index
    %c0_34 = arith.constant 0 : index
    %115 = vector.load %arg18[%114, %c0_34] : memref<16x32xf32, #tpu.memory_space<vmem>>, vector<2x32xf32>
    tpu.vector_store %arg18[%114, %c0_34], %113 {strides = array<i32>} : memref<16x32xf32, #tpu.memory_space<vmem>>, vector<2x32xf32>,
    %c2_i32_35 = arith.constant 2 : i32
    %c2_i32_36 = arith.constant 2 : i32
    %116 = arith.muli %c2_i32_35, %c2_i32_36 : i32
    %117 = tpu.assume_multiple %116, 2 : i32
    %118 = arith.index_cast %117 : i32 to index
    %c0_37 = arith.constant 0 : index
    %119 = vector.load %arg17[%118, %c0_37] : memref<16x128xf32, #tpu.memory_space<vmem>>, vector<2x128xf32>
    %cst_38 = arith.constant dense<0.000000e+00> : vector<2x128xf32>
    %120 = tpu.matmul %113, %31, %cst_38 {dimension_numbers = #tpu.dot_dimension_numbers<[1], [0], [0], [1], [0, 0, 1, 1], [], []>} : vector<2x32xf32>, vector<32x128xf32>, vector<2x128xf32> -> vector<2x128xf32>
    %121 = arith.addf %119, %120 : vector<2x128xf32>
    %122 = vector.extract_strided_slice %121 {offsets = [0, 0], sizes = [2, 32], strides = [1, 1]} : vector<2x128xf32> to vector<2x32xf32>
    %123 = vector.extract_strided_slice %121 {offsets = [0, 32], sizes = [2, 32], strides = [1, 1]} : vector<2x128xf32> to vector<2x32xf32>
    %124 = vector.extract_strided_slice %121 {offsets = [0, 64], sizes = [2, 32], strides = [1, 1]} : vector<2x128xf32> to vector<2x32xf32>
    %125 = math.tanh %124 : vector<2x32xf32>
    %126 = vector.extract_strided_slice %121 {offsets = [0, 96], sizes = [2, 32], strides = [1, 1]} : vector<2x128xf32> to vector<2x32xf32>
    %127 = arith.negf %126 : vector<2x32xf32>
    %128 = math.exp %127 : vector<2x32xf32>
    %cst_39 = arith.constant 1.000000e+00 : f32
    %129 = vector.broadcast %cst_39 : f32 to vector<2x32xf32>
    %130 = arith.addf %129, %128 : vector<2x32xf32>
    %131 = arith.divf %129, %130 : vector<2x32xf32>
    %cst_40 = arith.constant 0.000000e+00 : f32
    %132 = vector.broadcast %cst_40 : f32 to vector<2x32xf32>
    %133 = arith.minimumf %123, %132 : vector<2x32xf32>
    %134 = math.absf %123 : vector<2x32xf32>
    %cst_41 = arith.constant 0.000000e+00 : f32
    %135 = vector.broadcast %cst_41 : f32 to vector<2x32xf32>
    %136 = arith.subf %135, %134 : vector<2x32xf32>
    %137 = math.exp %136 : vector<2x32xf32>
    %cst_42 = arith.constant 1.000000e+00 : f32
    %138 = vector.broadcast %cst_42 : f32 to vector<2x32xf32>
    %139 = arith.addf %138, %137 : vector<2x32xf32>
    %140 = math.log %139 : vector<2x32xf32>
    %141 = arith.subf %133, %140 : vector<2x32xf32>
    %142 = arith.addf %141, %102 : vector<2x32xf32>
    %143 = arith.maximumf %142, %122 : vector<2x32xf32>
    %144 = arith.subf %122, %143 : vector<2x32xf32>
    %145 = math.exp %144 : vector<2x32xf32>
    %146 = arith.subf %142, %143 : vector<2x32xf32>
    %147 = math.exp %146 : vector<2x32xf32>
    %148 = arith.mulf %147, %109 : vector<2x32xf32>
    %149 = arith.mulf %145, %125 : vector<2x32xf32>
    %150 = arith.addf %148, %149 : vector<2x32xf32>
    %151 = arith.mulf %147, %111 : vector<2x32xf32>
    %152 = arith.addf %151, %145 : vector<2x32xf32>
    %153 = arith.divf %150, %152 : vector<2x32xf32>
    %154 = arith.mulf %131, %153 : vector<2x32xf32>
    %155 = arith.index_cast %117 : i32 to index
    %c0_43 = arith.constant 0 : index
    %156 = vector.load %arg18[%155, %c0_43] : memref<16x32xf32, #tpu.memory_space<vmem>>, vector<2x32xf32>
    tpu.vector_store %arg18[%155, %c0_43], %154 {strides = array<i32>} : memref<16x32xf32, #tpu.memory_space<vmem>>, vector<2x32xf32>,
    %c3_i32 = arith.constant 3 : i32
    %c2_i32_44 = arith.constant 2 : i32
    %157 = arith.muli %c3_i32, %c2_i32_44 : i32
    %158 = tpu.assume_multiple %157, 2 : i32
    %159 = arith.index_cast %158 : i32 to index
    %c0_45 = arith.constant 0 : index
    %160 = vector.load %arg17[%159, %c0_45] : memref<16x128xf32, #tpu.memory_space<vmem>>, vector<2x128xf32>
    %cst_46 = arith.constant dense<0.000000e+00> : vector<2x128xf32>
    %161 = tpu.matmul %154, %31, %cst_46 {dimension_numbers = #tpu.dot_dimension_numbers<[1], [0], [0], [1], [0, 0, 1, 1], [], []>} : vector<2x32xf32>, vector<32x128xf32>, vector<2x128xf32> -> vector<2x128xf32>
    %162 = arith.addf %160, %161 : vector<2x128xf32>
    %163 = vector.extract_strided_slice %162 {offsets = [0, 0], sizes = [2, 32], strides = [1, 1]} : vector<2x128xf32> to vector<2x32xf32>
    %164 = vector.extract_strided_slice %162 {offsets = [0, 32], sizes = [2, 32], strides = [1, 1]} : vector<2x128xf32> to vector<2x32xf32>
    %165 = vector.extract_strided_slice %162 {offsets = [0, 64], sizes = [2, 32], strides = [1, 1]} : vector<2x128xf32> to vector<2x32xf32>
    %166 = math.tanh %165 : vector<2x32xf32>
    %167 = vector.extract_strided_slice %162 {offsets = [0, 96], sizes = [2, 32], strides = [1, 1]} : vector<2x128xf32> to vector<2x32xf32>
    %168 = arith.negf %167 : vector<2x32xf32>
    %169 = math.exp %168 : vector<2x32xf32>
    %cst_47 = arith.constant 1.000000e+00 : f32
    %170 = vector.broadcast %cst_47 : f32 to vector<2x32xf32>
    %171 = arith.addf %170, %169 : vector<2x32xf32>
    %172 = arith.divf %170, %171 : vector<2x32xf32>
    %cst_48 = arith.constant 0.000000e+00 : f32
    %173 = vector.broadcast %cst_48 : f32 to vector<2x32xf32>
    %174 = arith.minimumf %164, %173 : vector<2x32xf32>
    %175 = math.absf %164 : vector<2x32xf32>
    %cst_49 = arith.constant 0.000000e+00 : f32
    %176 = vector.broadcast %cst_49 : f32 to vector<2x32xf32>
    %177 = arith.subf %176, %175 : vector<2x32xf32>
    %178 = math.exp %177 : vector<2x32xf32>
    %cst_50 = arith.constant 1.000000e+00 : f32
    %179 = vector.broadcast %cst_50 : f32 to vector<2x32xf32>
    %180 = arith.addf %179, %178 : vector<2x32xf32>
    %181 = math.log %180 : vector<2x32xf32>
    %182 = arith.subf %174, %181 : vector<2x32xf32>
    %183 = arith.addf %182, %143 : vector<2x32xf32>
    %184 = arith.maximumf %183, %163 : vector<2x32xf32>
    %185 = arith.subf %163, %184 : vector<2x32xf32>
    %186 = math.exp %185 : vector<2x32xf32>
    %187 = arith.subf %183, %184 : vector<2x32xf32>
    %188 = math.exp %187 : vector<2x32xf32>
    %189 = arith.mulf %188, %150 : vector<2x32xf32>
    %190 = arith.mulf %186, %166 : vector<2x32xf32>
    %191 = arith.addf %189, %190 : vector<2x32xf32>
    %192 = arith.mulf %188, %152 : vector<2x32xf32>
    %193 = arith.addf %192, %186 : vector<2x32xf32>
    %194 = arith.divf %191, %193 : vector<2x32xf32>
    %195 = arith.mulf %172, %194 : vector<2x32xf32>
    %196 = arith.index_cast %158 : i32 to index
    %c0_51 = arith.constant 0 : index
    %197 = vector.load %arg18[%196, %c0_51] : memref<16x32xf32, #tpu.memory_space<vmem>>, vector<2x32xf32>
    tpu.vector_store %arg18[%196, %c0_51], %195 {strides = array<i32>} : memref<16x32xf32, #tpu.memory_space<vmem>>, vector<2x32xf32>,
    %c4_i32 = arith.constant 4 : i32
    %c2_i32_52 = arith.constant 2 : i32
    %198 = arith.muli %c4_i32, %c2_i32_52 : i32
    %199 = tpu.assume_multiple %198, 2 : i32
    %200 = arith.index_cast %199 : i32 to index
    %c0_53 = arith.constant 0 : index
    %201 = vector.load %arg17[%200, %c0_53] : memref<16x128xf32, #tpu.memory_space<vmem>>, vector<2x128xf32>
    %cst_54 = arith.constant dense<0.000000e+00> : vector<2x128xf32>
    %202 = tpu.matmul %195, %31, %cst_54 {dimension_numbers = #tpu.dot_dimension_numbers<[1], [0], [0], [1], [0, 0, 1, 1], [], []>} : vector<2x32xf32>, vector<32x128xf32>, vector<2x128xf32> -> vector<2x128xf32>
    %203 = arith.addf %201, %202 : vector<2x128xf32>
    %204 = vector.extract_strided_slice %203 {offsets = [0, 0], sizes = [2, 32], strides = [1, 1]} : vector<2x128xf32> to vector<2x32xf32>
    %205 = vector.extract_strided_slice %203 {offsets = [0, 32], sizes = [2, 32], strides = [1, 1]} : vector<2x128xf32> to vector<2x32xf32>
    %206 = vector.extract_strided_slice %203 {offsets = [0, 64], sizes = [2, 32], strides = [1, 1]} : vector<2x128xf32> to vector<2x32xf32>
    %207 = math.tanh %206 : vector<2x32xf32>
    %208 = vector.extract_strided_slice %203 {offsets = [0, 96], sizes = [2, 32], strides = [1, 1]} : vector<2x128xf32> to vector<2x32xf32>
    %209 = arith.negf %208 : vector<2x32xf32>
    %210 = math.exp %209 : vector<2x32xf32>
    %cst_55 = arith.constant 1.000000e+00 : f32
    %211 = vector.broadcast %cst_55 : f32 to vector<2x32xf32>
    %212 = arith.addf %211, %210 : vector<2x32xf32>
    %213 = arith.divf %211, %212 : vector<2x32xf32>
    %cst_56 = arith.constant 0.000000e+00 : f32
    %214 = vector.broadcast %cst_56 : f32 to vector<2x32xf32>
    %215 = arith.minimumf %205, %214 : vector<2x32xf32>
    %216 = math.absf %205 : vector<2x32xf32>
    %cst_57 = arith.constant 0.000000e+00 : f32
    %217 = vector.broadcast %cst_57 : f32 to vector<2x32xf32>
    %218 = arith.subf %217, %216 : vector<2x32xf32>
    %219 = math.exp %218 : vector<2x32xf32>
    %cst_58 = arith.constant 1.000000e+00 : f32
    %220 = vector.broadcast %cst_58 : f32 to vector<2x32xf32>
    %221 = arith.addf %220, %219 : vector<2x32xf32>
    %222 = math.log %221 : vector<2x32xf32>
    %223 = arith.subf %215, %222 : vector<2x32xf32>
    %224 = arith.addf %223, %184 : vector<2x32xf32>
    %225 = arith.maximumf %224, %204 : vector<2x32xf32>
    %226 = arith.subf %204, %225 : vector<2x32xf32>
    %227 = math.exp %226 : vector<2x32xf32>
    %228 = arith.subf %224, %225 : vector<2x32xf32>
    %229 = math.exp %228 : vector<2x32xf32>
    %230 = arith.mulf %229, %191 : vector<2x32xf32>
    %231 = arith.mulf %227, %207 : vector<2x32xf32>
    %232 = arith.addf %230, %231 : vector<2x32xf32>
    %233 = arith.mulf %229, %193 : vector<2x32xf32>
    %234 = arith.addf %233, %227 : vector<2x32xf32>
    %235 = arith.divf %232, %234 : vector<2x32xf32>
    %236 = arith.mulf %213, %235 : vector<2x32xf32>
    %237 = arith.index_cast %199 : i32 to index
    %c0_59 = arith.constant 0 : index
    %238 = vector.load %arg18[%237, %c0_59] : memref<16x32xf32, #tpu.memory_space<vmem>>, vector<2x32xf32>
    tpu.vector_store %arg18[%237, %c0_59], %236 {strides = array<i32>} : memref<16x32xf32, #tpu.memory_space<vmem>>, vector<2x32xf32>,
    %c5_i32 = arith.constant 5 : i32
    %c2_i32_60 = arith.constant 2 : i32
    %239 = arith.muli %c5_i32, %c2_i32_60 : i32
    %240 = tpu.assume_multiple %239, 2 : i32
    %241 = arith.index_cast %240 : i32 to index
    %c0_61 = arith.constant 0 : index
    %242 = vector.load %arg17[%241, %c0_61] : memref<16x128xf32, #tpu.memory_space<vmem>>, vector<2x128xf32>
    %cst_62 = arith.constant dense<0.000000e+00> : vector<2x128xf32>
    %243 = tpu.matmul %236, %31, %cst_62 {dimension_numbers = #tpu.dot_dimension_numbers<[1], [0], [0], [1], [0, 0, 1, 1], [], []>} : vector<2x32xf32>, vector<32x128xf32>, vector<2x128xf32> -> vector<2x128xf32>
    %244 = arith.addf %242, %243 : vector<2x128xf32>
    %245 = vector.extract_strided_slice %244 {offsets = [0, 0], sizes = [2, 32], strides = [1, 1]} : vector<2x128xf32> to vector<2x32xf32>
    %246 = vector.extract_strided_slice %244 {offsets = [0, 32], sizes = [2, 32], strides = [1, 1]} : vector<2x128xf32> to vector<2x32xf32>
    %247 = vector.extract_strided_slice %244 {offsets = [0, 64], sizes = [2, 32], strides = [1, 1]} : vector<2x128xf32> to vector<2x32xf32>
    %248 = math.tanh %247 : vector<2x32xf32>
    %249 = vector.extract_strided_slice %244 {offsets = [0, 96], sizes = [2, 32], strides = [1, 1]} : vector<2x128xf32> to vector<2x32xf32>
    %250 = arith.negf %249 : vector<2x32xf32>
    %251 = math.exp %250 : vector<2x32xf32>
    %cst_63 = arith.constant 1.000000e+00 : f32
    %252 = vector.broadcast %cst_63 : f32 to vector<2x32xf32>
    %253 = arith.addf %252, %251 : vector<2x32xf32>
    %254 = arith.divf %252, %253 : vector<2x32xf32>
    %cst_64 = arith.constant 0.000000e+00 : f32
    %255 = vector.broadcast %cst_64 : f32 to vector<2x32xf32>
    %256 = arith.minimumf %246, %255 : vector<2x32xf32>
    %257 = math.absf %246 : vector<2x32xf32>
    %cst_65 = arith.constant 0.000000e+00 : f32
    %258 = vector.broadcast %cst_65 : f32 to vector<2x32xf32>
    %259 = arith.subf %258, %257 : vector<2x32xf32>
    %260 = math.exp %259 : vector<2x32xf32>
    %cst_66 = arith.constant 1.000000e+00 : f32
    %261 = vector.broadcast %cst_66 : f32 to vector<2x32xf32>
    %262 = arith.addf %261, %260 : vector<2x32xf32>
    %263 = math.log %262 : vector<2x32xf32>
    %264 = arith.subf %256, %263 : vector<2x32xf32>
    %265 = arith.addf %264, %225 : vector<2x32xf32>
    %266 = arith.maximumf %265, %245 : vector<2x32xf32>
    %267 = arith.subf %245, %266 : vector<2x32xf32>
    %268 = math.exp %267 : vector<2x32xf32>
    %269 = arith.subf %265, %266 : vector<2x32xf32>
    %270 = math.exp %269 : vector<2x32xf32>
    %271 = arith.mulf %270, %232 : vector<2x32xf32>
    %272 = arith.mulf %268, %248 : vector<2x32xf32>
    %273 = arith.addf %271, %272 : vector<2x32xf32>
    %274 = arith.mulf %270, %234 : vector<2x32xf32>
    %275 = arith.addf %274, %268 : vector<2x32xf32>
    %276 = arith.divf %273, %275 : vector<2x32xf32>
    %277 = arith.mulf %254, %276 : vector<2x32xf32>
    %278 = arith.index_cast %240 : i32 to index
    %c0_67 = arith.constant 0 : index
    %279 = vector.load %arg18[%278, %c0_67] : memref<16x32xf32, #tpu.memory_space<vmem>>, vector<2x32xf32>
    tpu.vector_store %arg18[%278, %c0_67], %277 {strides = array<i32>} : memref<16x32xf32, #tpu.memory_space<vmem>>, vector<2x32xf32>,
    %c6_i32 = arith.constant 6 : i32
    %c2_i32_68 = arith.constant 2 : i32
    %280 = arith.muli %c6_i32, %c2_i32_68 : i32
    %281 = tpu.assume_multiple %280, 2 : i32
    %282 = arith.index_cast %281 : i32 to index
    %c0_69 = arith.constant 0 : index
    %283 = vector.load %arg17[%282, %c0_69] : memref<16x128xf32, #tpu.memory_space<vmem>>, vector<2x128xf32>
    %cst_70 = arith.constant dense<0.000000e+00> : vector<2x128xf32>
    %284 = tpu.matmul %277, %31, %cst_70 {dimension_numbers = #tpu.dot_dimension_numbers<[1], [0], [0], [1], [0, 0, 1, 1], [], []>} : vector<2x32xf32>, vector<32x128xf32>, vector<2x128xf32> -> vector<2x128xf32>
    %285 = arith.addf %283, %284 : vector<2x128xf32>
    %286 = vector.extract_strided_slice %285 {offsets = [0, 0], sizes = [2, 32], strides = [1, 1]} : vector<2x128xf32> to vector<2x32xf32>
    %287 = vector.extract_strided_slice %285 {offsets = [0, 32], sizes = [2, 32], strides = [1, 1]} : vector<2x128xf32> to vector<2x32xf32>
    %288 = vector.extract_strided_slice %285 {offsets = [0, 64], sizes = [2, 32], strides = [1, 1]} : vector<2x128xf32> to vector<2x32xf32>
    %289 = math.tanh %288 : vector<2x32xf32>
    %290 = vector.extract_strided_slice %285 {offsets = [0, 96], sizes = [2, 32], strides = [1, 1]} : vector<2x128xf32> to vector<2x32xf32>
    %291 = arith.negf %290 : vector<2x32xf32>
    %292 = math.exp %291 : vector<2x32xf32>
    %cst_71 = arith.constant 1.000000e+00 : f32
    %293 = vector.broadcast %cst_71 : f32 to vector<2x32xf32>
    %294 = arith.addf %293, %292 : vector<2x32xf32>
    %295 = arith.divf %293, %294 : vector<2x32xf32>
    %cst_72 = arith.constant 0.000000e+00 : f32
    %296 = vector.broadcast %cst_72 : f32 to vector<2x32xf32>
    %297 = arith.minimumf %287, %296 : vector<2x32xf32>
    %298 = math.absf %287 : vector<2x32xf32>
    %cst_73 = arith.constant 0.000000e+00 : f32
    %299 = vector.broadcast %cst_73 : f32 to vector<2x32xf32>
    %300 = arith.subf %299, %298 : vector<2x32xf32>
    %301 = math.exp %300 : vector<2x32xf32>
    %cst_74 = arith.constant 1.000000e+00 : f32
    %302 = vector.broadcast %cst_74 : f32 to vector<2x32xf32>
    %303 = arith.addf %302, %301 : vector<2x32xf32>
    %304 = math.log %303 : vector<2x32xf32>
    %305 = arith.subf %297, %304 : vector<2x32xf32>
    %306 = arith.addf %305, %266 : vector<2x32xf32>
    %307 = arith.maximumf %306, %286 : vector<2x32xf32>
    %308 = arith.subf %286, %307 : vector<2x32xf32>
    %309 = math.exp %308 : vector<2x32xf32>
    %310 = arith.subf %306, %307 : vector<2x32xf32>
    %311 = math.exp %310 : vector<2x32xf32>
    %312 = arith.mulf %311, %273 : vector<2x32xf32>
    %313 = arith.mulf %309, %289 : vector<2x32xf32>
    %314 = arith.addf %312, %313 : vector<2x32xf32>
    %315 = arith.mulf %311, %275 : vector<2x32xf32>
    %316 = arith.addf %315, %309 : vector<2x32xf32>
    %317 = arith.divf %314, %316 : vector<2x32xf32>
    %318 = arith.mulf %295, %317 : vector<2x32xf32>
    %319 = arith.index_cast %281 : i32 to index
    %c0_75 = arith.constant 0 : index
    %320 = vector.load %arg18[%319, %c0_75] : memref<16x32xf32, #tpu.memory_space<vmem>>, vector<2x32xf32>
    tpu.vector_store %arg18[%319, %c0_75], %318 {strides = array<i32>} : memref<16x32xf32, #tpu.memory_space<vmem>>, vector<2x32xf32>,
    %c7_i32 = arith.constant 7 : i32
    %c2_i32_76 = arith.constant 2 : i32
    %321 = arith.muli %c7_i32, %c2_i32_76 : i32
    %322 = tpu.assume_multiple %321, 2 : i32
    %323 = arith.index_cast %322 : i32 to index
    %c0_77 = arith.constant 0 : index
    %324 = vector.load %arg17[%323, %c0_77] : memref<16x128xf32, #tpu.memory_space<vmem>>, vector<2x128xf32>
    %cst_78 = arith.constant dense<0.000000e+00> : vector<2x128xf32>
    %325 = tpu.matmul %318, %31, %cst_78 {dimension_numbers = #tpu.dot_dimension_numbers<[1], [0], [0], [1], [0, 0, 1, 1], [], []>} : vector<2x32xf32>, vector<32x128xf32>, vector<2x128xf32> -> vector<2x128xf32>
    %326 = arith.addf %324, %325 : vector<2x128xf32>
    %327 = vector.extract_strided_slice %326 {offsets = [0, 0], sizes = [2, 32], strides = [1, 1]} : vector<2x128xf32> to vector<2x32xf32>
    %328 = vector.extract_strided_slice %326 {offsets = [0, 32], sizes = [2, 32], strides = [1, 1]} : vector<2x128xf32> to vector<2x32xf32>
    %329 = vector.extract_strided_slice %326 {offsets = [0, 64], sizes = [2, 32], strides = [1, 1]} : vector<2x128xf32> to vector<2x32xf32>
    %330 = math.tanh %329 : vector<2x32xf32>
    %331 = vector.extract_strided_slice %326 {offsets = [0, 96], sizes = [2, 32], strides = [1, 1]} : vector<2x128xf32> to vector<2x32xf32>
    %332 = arith.negf %331 : vector<2x32xf32>
    %333 = math.exp %332 : vector<2x32xf32>
    %cst_79 = arith.constant 1.000000e+00 : f32
    %334 = vector.broadcast %cst_79 : f32 to vector<2x32xf32>
    %335 = arith.addf %334, %333 : vector<2x32xf32>
    %336 = arith.divf %334, %335 : vector<2x32xf32>
    %cst_80 = arith.constant 0.000000e+00 : f32
    %337 = vector.broadcast %cst_80 : f32 to vector<2x32xf32>
    %338 = arith.minimumf %328, %337 : vector<2x32xf32>
    %339 = math.absf %328 : vector<2x32xf32>
    %cst_81 = arith.constant 0.000000e+00 : f32
    %340 = vector.broadcast %cst_81 : f32 to vector<2x32xf32>
    %341 = arith.subf %340, %339 : vector<2x32xf32>
    %342 = math.exp %341 : vector<2x32xf32>
    %cst_82 = arith.constant 1.000000e+00 : f32
    %343 = vector.broadcast %cst_82 : f32 to vector<2x32xf32>
    %344 = arith.addf %343, %342 : vector<2x32xf32>
    %345 = math.log %344 : vector<2x32xf32>
    %346 = arith.subf %338, %345 : vector<2x32xf32>
    %347 = arith.addf %346, %307 : vector<2x32xf32>
    %348 = arith.maximumf %347, %327 : vector<2x32xf32>
    %349 = arith.subf %327, %348 : vector<2x32xf32>
    %350 = math.exp %349 : vector<2x32xf32>
    %351 = arith.subf %347, %348 : vector<2x32xf32>
    %352 = math.exp %351 : vector<2x32xf32>
    %353 = arith.mulf %352, %314 : vector<2x32xf32>
    %354 = arith.mulf %350, %330 : vector<2x32xf32>
    %355 = arith.addf %353, %354 : vector<2x32xf32>
    %356 = arith.mulf %352, %316 : vector<2x32xf32>
    %357 = arith.addf %356, %350 : vector<2x32xf32>
    %358 = arith.divf %355, %357 : vector<2x32xf32>
    %359 = arith.mulf %336, %358 : vector<2x32xf32>
    %360 = arith.index_cast %322 : i32 to index
    %c0_83 = arith.constant 0 : index
    %361 = vector.load %arg18[%360, %c0_83] : memref<16x32xf32, #tpu.memory_space<vmem>>, vector<2x32xf32>
    tpu.vector_store %arg18[%360, %c0_83], %359 {strides = array<i32>} : memref<16x32xf32, #tpu.memory_space<vmem>>, vector<2x32xf32>,
    %c8_i32 = arith.constant 8 : i32
    %c0_84 = arith.constant 0 : index
    %c0_85 = arith.constant 0 : index
    %362 = vector.load %arg18[%c0_84, %c0_85] : memref<16x32xf32, #tpu.memory_space<vmem>>, vector<16x32xf32>
    %c0_86 = arith.constant 0 : index
    %c0_87 = arith.constant 0 : index
    %363 = vector.load %arg7[%c0_86, %c0_87] : memref<32x32xf32, #tpu.memory_space<vmem>>, vector<32x32xf32>
    %cst_88 = arith.constant dense<0.000000e+00> : vector<16x32xf32>
    %364 = tpu.matmul %362, %363, %cst_88 {dimension_numbers = #tpu.dot_dimension_numbers<[1], [0], [0], [1], [0, 0, 1, 1], [], []>} : vector<16x32xf32>, vector<32x32xf32>, vector<16x32xf32> -> vector<16x32xf32>
    %365 = arith.subf %362, %364 : vector<16x32xf32>
    %366 = arith.mulf %365, %365 : vector<16x32xf32>
    %cst_89 = arith.constant dense<0.000000e+00> : vector<16x32xf32>
    %367 = tpu.matmul %366, %363, %cst_89 {dimension_numbers = #tpu.dot_dimension_numbers<[1], [0], [0], [1], [0, 0, 1, 1], [], []>} : vector<16x32xf32>, vector<32x32xf32>, vector<16x32xf32> -> vector<16x32xf32>
    %cst_90 = arith.constant 9.99999974E-6 : f32
    %368 = vector.broadcast %cst_90 : f32 to vector<16x32xf32>
    %369 = arith.addf %367, %368 : vector<16x32xf32>
    %370 = math.rsqrt %369 : vector<16x32xf32>
    %371 = arith.mulf %365, %370 : vector<16x32xf32>
    %c0_91 = arith.constant 0 : index
    %c0_92 = arith.constant 0 : index
    %372 = vector.load %arg8[%c0_91, %c0_92] : memref<1x32xf32, #tpu.memory_space<vmem>>, vector<1x32xf32>
    %373 = vector.broadcast %372 : vector<1x32xf32> to vector<16x32xf32>
    %374 = arith.mulf %371, %373 : vector<16x32xf32>
    %c0_93 = arith.constant 0 : index
    %c0_94 = arith.constant 0 : index
    %375 = vector.load %arg9[%c0_93, %c0_94] : memref<1x32xf32, #tpu.memory_space<vmem>>, vector<1x32xf32>
    %376 = vector.broadcast %375 : vector<1x32xf32> to vector<16x32xf32>
    %377 = arith.addf %374, %376 : vector<16x32xf32>
    %378 = arith.addf %377, %0 : vector<16x32xf32>
    %cst_95 = arith.constant dense<0.000000e+00> : vector<16xf32>
    %379 = vector.multi_reduction <add>, %378, %cst_95 [1] : vector<16x32xf32> to vector<16xf32>
    %380 = vector.shape_cast %379 : vector<16xf32> to vector<16x1xf32>
    %cst_96 = arith.constant 3.200000e+01 : f32
    %381 = vector.broadcast %cst_96 : f32 to vector<16x1xf32>
    %382 = arith.divf %380, %381 : vector<16x1xf32>
    %383 = vector.broadcast %382 : vector<16x1xf32> to vector<16x32xf32>
    %384 = arith.subf %378, %383 : vector<16x32xf32>
    %385 = arith.mulf %384, %384 : vector<16x32xf32>
    %cst_97 = arith.constant dense<0.000000e+00> : vector<16xf32>
    %386 = vector.multi_reduction <add>, %385, %cst_97 [1] : vector<16x32xf32> to vector<16xf32>
    %387 = vector.shape_cast %386 : vector<16xf32> to vector<16x1xf32>
    %cst_98 = arith.constant 3.200000e+01 : f32
    %388 = vector.broadcast %cst_98 : f32 to vector<16x1xf32>
    %389 = arith.divf %387, %388 : vector<16x1xf32>
    %390 = vector.broadcast %382 : vector<16x1xf32> to vector<16x32xf32>
    %391 = arith.subf %378, %390 : vector<16x32xf32>
    %cst_99 = arith.constant 9.99999974E-6 : f32
    %392 = vector.broadcast %cst_99 : f32 to vector<16x1xf32>
    %393 = arith.addf %389, %392 : vector<16x1xf32>
    %394 = math.rsqrt %393 : vector<16x1xf32>
    %395 = vector.broadcast %394 : vector<16x1xf32> to vector<16x32xf32>
    %396 = arith.mulf %391, %395 : vector<16x32xf32>
    %c0_100 = arith.constant 0 : index
    %c0_101 = arith.constant 0 : index
    %397 = vector.load %arg10[%c0_100, %c0_101] : memref<1x32xf32, #tpu.memory_space<vmem>>, vector<1x32xf32>
    %398 = vector.broadcast %397 : vector<1x32xf32> to vector<16x32xf32>
    %399 = arith.mulf %396, %398 : vector<16x32xf32>
    %c0_102 = arith.constant 0 : index
    %c0_103 = arith.constant 0 : index
    %400 = vector.load %arg11[%c0_102, %c0_103] : memref<1x32xf32, #tpu.memory_space<vmem>>, vector<1x32xf32>
    %401 = vector.broadcast %400 : vector<1x32xf32> to vector<16x32xf32>
    %402 = arith.addf %399, %401 : vector<16x32xf32>
    %c0_104 = arith.constant 0 : index
    %c0_105 = arith.constant 0 : index
    %403 = vector.load %arg12[%c0_104, %c0_105] : memref<32x128xf32, #tpu.memory_space<vmem>>, vector<32x128xf32>
    %cst_106 = arith.constant dense<0.000000e+00> : vector<16x128xf32>
    %404 = tpu.matmul %402, %403, %cst_106 {dimension_numbers = #tpu.dot_dimension_numbers<[1], [0], [0], [1], [0, 0, 1, 1], [], []>} : vector<16x32xf32>, vector<32x128xf32>, vector<16x128xf32> -> vector<16x128xf32>
    %c0_107 = arith.constant 0 : index
    %c0_108 = arith.constant 0 : index
    %405 = vector.load %arg13[%c0_107, %c0_108] : memref<1x128xf32, #tpu.memory_space<vmem>>, vector<1x128xf32>
    %406 = vector.broadcast %405 : vector<1x128xf32> to vector<16x128xf32>
    %407 = arith.addf %404, %406 : vector<16x128xf32>
    %408 = vector.extract_strided_slice %407 {offsets = [0, 0], sizes = [16, 64], strides = [1, 1]} : vector<16x128xf32> to vector<16x64xf32>
    %409 = vector.extract_strided_slice %407 {offsets = [0, 64], sizes = [16, 64], strides = [1, 1]} : vector<16x128xf32> to vector<16x64xf32>
    %cst_109 = arith.constant 5.000000e-01 : f32
    %410 = vector.broadcast %cst_109 : f32 to vector<16x64xf32>
    %411 = arith.mulf %410, %409 : vector<16x64xf32>
    %cst_110 = arith.constant 0.707106769 : f32
    %412 = vector.broadcast %cst_110 : f32 to vector<16x64xf32>
    %413 = arith.mulf %409, %412 : vector<16x64xf32>
    %414 = math.erf %413 : vector<16x64xf32>
    %cst_111 = arith.constant 1.000000e+00 : f32
    %415 = vector.broadcast %cst_111 : f32 to vector<16x64xf32>
    %416 = arith.addf %415, %414 : vector<16x64xf32>
    %417 = arith.mulf %411, %416 : vector<16x64xf32>
    %418 = arith.mulf %408, %417 : vector<16x64xf32>
    %c0_112 = arith.constant 0 : index
    %c0_113 = arith.constant 0 : index
    %419 = vector.load %arg14[%c0_112, %c0_113] : memref<64x32xf32, #tpu.memory_space<vmem>>, vector<64x32xf32>
    %cst_114 = arith.constant dense<0.000000e+00> : vector<16x32xf32>
    %420 = tpu.matmul %418, %419, %cst_114 {dimension_numbers = #tpu.dot_dimension_numbers<[1], [0], [0], [1], [0, 0, 1, 1], [], []>} : vector<16x64xf32>, vector<64x32xf32>, vector<16x32xf32> -> vector<16x32xf32>
    %c0_115 = arith.constant 0 : index
    %c0_116 = arith.constant 0 : index
    %421 = vector.load %arg15[%c0_115, %c0_116] : memref<1x32xf32, #tpu.memory_space<vmem>>, vector<1x32xf32>
    %422 = vector.broadcast %421 : vector<1x32xf32> to vector<16x32xf32>
    %423 = arith.addf %420, %422 : vector<16x32xf32>
    %424 = arith.addf %423, %378 : vector<16x32xf32>
    %c0_117 = arith.constant 0 : index
    %c0_118 = arith.constant 0 : index
    %425 = vector.load %arg16[%c0_117, %c0_118] : memref<16x32xf32, #tpu.memory_space<vmem>>, vector<16x32xf32>
    tpu.vector_store %arg16[%c0_117, %c0_118], %424 {strides = array<i32>} : memref<16x32xf32, #tpu.memory_space<vmem>>, vector<16x32xf32>,
    return
  }
  func.func @transform_0(%arg0: i32) -> (i32, i32) {
    %c0_i32 = arith.constant 0 : i32
    %c0_i32_0 = arith.constant 0 : i32
    %c0_i32_1 = arith.constant 0 : i32
    return %c0_i32, %c0_i32_0 : i32, i32
  }
  func.func @transform_1(%arg0: i32) -> (i32, i32) {
    %c0_i32 = arith.constant 0 : i32
    %c0_i32_0 = arith.constant 0 : i32
    %c0_i32_1 = arith.constant 0 : i32
    return %c0_i32, %c0_i32_0 : i32, i32
  }
  func.func @transform_2(%arg0: i32) -> (i32, i32) {
    %c0_i32 = arith.constant 0 : i32
    %c0_i32_0 = arith.constant 0 : i32
    %c0_i32_1 = arith.constant 0 : i32
    return %c0_i32, %c0_i32_0 : i32, i32
  }
  func.func @transform_3(%arg0: i32) -> (i32, i32) {
    %c0_i32 = arith.constant 0 : i32
    %c0_i32_0 = arith.constant 0 : i32
    %c0_i32_1 = arith.constant 0 : i32
    return %c0_i32, %c0_i32_0 : i32, i32
  }
  func.func @transform_4(%arg0: i32) -> (i32, i32) {
    %c0_i32 = arith.constant 0 : i32
    %c0_i32_0 = arith.constant 0 : i32
    %c0_i32_1 = arith.constant 0 : i32
    return %c0_i32, %c0_i32_0 : i32, i32
  }
  func.func @transform_5(%arg0: i32) -> (i32, i32) {
    %c0_i32 = arith.constant 0 : i32
    %c0_i32_0 = arith.constant 0 : i32
    %c0_i32_1 = arith.constant 0 : i32
    return %c0_i32, %c0_i32_0 : i32, i32
  }
  func.func @transform_6(%arg0: i32) -> (i32, i32) {
    %c0_i32 = arith.constant 0 : i32
    %c0_i32_0 = arith.constant 0 : i32
    %c0_i32_1 = arith.constant 0 : i32
    return %c0_i32, %c0_i32_0 : i32, i32
  }
  func.func @transform_7(%arg0: i32) -> (i32, i32) {
    %c0_i32 = arith.constant 0 : i32
    %c0_i32_0 = arith.constant 0 : i32
    %c0_i32_1 = arith.constant 0 : i32
    return %c0_i32, %c0_i32_0 : i32, i32
  }
  func.func @transform_8(%arg0: i32) -> (i32, i32) {
    %c0_i32 = arith.constant 0 : i32
    %c0_i32_0 = arith.constant 0 : i32
    %c0_i32_1 = arith.constant 0 : i32
    return %c0_i32, %c0_i32_0 : i32, i32
  }
  func.func @transform_9(%arg0: i32) -> (i32, i32) {
    %c0_i32 = arith.constant 0 : i32
    %c0_i32_0 = arith.constant 0 : i32
    %c0_i32_1 = arith.constant 0 : i32
    return %c0_i32, %c0_i32_0 : i32, i32
  }
  func.func @transform_10(%arg0: i32) -> (i32, i32) {
    %c0_i32 = arith.constant 0 : i32
    %c0_i32_0 = arith.constant 0 : i32
    %c0_i32_1 = arith.constant 0 : i32
    return %c0_i32, %c0_i32_0 : i32, i32
  }
  func.func @transform_11(%arg0: i32) -> (i32, i32) {
    %c0_i32 = arith.constant 0 : i32
    %c0_i32_0 = arith.constant 0 : i32
    %c0_i32_1 = arith.constant 0 : i32
    return %c0_i32, %c0_i32_0 : i32, i32
  }
  func.func @transform_12(%arg0: i32) -> (i32, i32) {
    %c0_i32 = arith.constant 0 : i32
    %c0_i32_0 = arith.constant 0 : i32
    %c0_i32_1 = arith.constant 0 : i32
    return %c0_i32, %c0_i32_0 : i32, i32
  }
  func.func @transform_13(%arg0: i32) -> (i32, i32) {
    %c0_i32 = arith.constant 0 : i32
    %c0_i32_0 = arith.constant 0 : i32
    %c0_i32_1 = arith.constant 0 : i32
    return %c0_i32, %c0_i32_0 : i32, i32
  }
  func.func @transform_14(%arg0: i32) -> (i32, i32) {
    %c0_i32 = arith.constant 0 : i32
    %c0_i32_0 = arith.constant 0 : i32
    %c0_i32_1 = arith.constant 0 : i32
    return %c0_i32, %c0_i32_0 : i32, i32
  }
  func.func @transform_15(%arg0: i32) -> (i32, i32) {
    %c0_i32 = arith.constant 0 : i32
    %c0_i32_0 = arith.constant 0 : i32
    %c0_i32_1 = arith.constant 0 : i32
    return %c0_i32, %c0_i32_0 : i32, i32
  }
}

</mosaic_0001>

<llo_original>
// kernel: mul.36
$region0: #{mul.36}
  %s0 = inlined_call_operand.vmem [shape: f32[8,32], index: 0, kind: input, shape index: {}]
  %s1 = inlined_call_operand.vmem [shape: f32[8,4,8], index: 1, kind: output, shape index: {}]
  $region1: #{mul.36} parent=0
    #allocation0 [shape = 'u8[32768]{0}', space=vmem, size = 0x8000, scoped, tag = 'scoped mem for output reshape']
    %v2 = vld [vmem:[%s0] sm:$0xff]
    %vm3 = vcmask 64512
    %4 = vst.msk [vmem:[#allocation0] ss:$8 sm:$0xf] %vm3, %v2
    %5 = vst.msk [vmem:[#allocation0] ss:$8 sm:$0xf0] %vm3, %v2
    %v6 = vld [vmem:[%s0] sm:$0xff]
    %7 = vrot.lane.b32.xlu0 %v6, 120
    %v8 = vpop.permute.xlu0 %7
    %vm9 = vcmask 64512
    %s10 = scalar_lea.vmem [#allocation0], 1
    %11 = vst.msk [vmem:[%s10] ss:$8 sm:$0xf] %vm9, %v8
    %s12 = scalar_lea.vmem [#allocation0], 1
    %13 = vst.msk [vmem:[%s12] ss:$8 sm:$0xf0] %vm9, %v8
    %v14 = vld [vmem:[%s0] sm:$0xff]
    %15 = vrot.lane.b32.xlu0 %v14, 112
    %v16 = vpop.permute.xlu0 %15
    %vm17 = vcmask 64512
    %s18 = scalar_lea.vmem [#allocation0], 2
    %19 = vst.msk [vmem:[%s18] ss:$8 sm:$0xf] %vm17, %v16
    %s20 = scalar_lea.vmem [#allocation0], 2
    %21 = vst.msk [vmem:[%s20] ss:$8 sm:$0xf0] %vm17, %v16
    %v22 = vld [vmem:[%s0] sm:$0xff]
    %23 = vrot.lane.b32.xlu0 %v22, 104
    %v24 = vpop.permute.xlu0 %23
    %vm25 = vcmask 64512
    %s26 = scalar_lea.vmem [#allocation0], 3
    %27 = vst.msk [vmem:[%s26] ss:$8 sm:$0xf] %vm25, %v24
    %s28 = scalar_lea.vmem [#allocation0], 3
    %29 = vst.msk [vmem:[%s28] ss:$8 sm:$0xf0] %vm25, %v24
    %s31 = sshllo.u32 0, 4
    %v33 = vld [vmem:[#allocation0] sm:%s31]
    %s34 = sshllo.u32 0, 4
    %35 = vst [vmem:[%s1] sm:%s34] %v33
    %s36 = scalar_lea.vmem [#allocation0], 8
    %v37 = vld [vmem:[%s36] sm:%s31]
    %s38 = sshllo.u32 0, 4
    %s39 = scalar_lea.vmem %s1, 4
    %40 = vst [vmem:[%s39] sm:%s38] %v37
    %s41 = scalar_lea.vmem [#allocation0], 16
    %v42 = vld [vmem:[%s41] sm:%s31]
    %s43 = sshllo.u32 0, 4
    %s44 = smul.addr 4, 2
    %s45 = scalar_lea.vmem %s1, %s44
    %46 = vst [vmem:[%s45] sm:%s43] %v42
    %s47 = scalar_lea.vmem [#allocation0], 24
    %v48 = vld [vmem:[%s47] sm:%s31]
    %s49 = sshllo.u32 0, 4
    %s50 = smul.addr 4, 3
    %s51 = scalar_lea.vmem %s1, %s50
    %52 = vst [vmem:[%s51] sm:%s49] %v48
    %s53 = scalar_lea.vmem [#allocation0], 32
    %v54 = vld [vmem:[%s53] sm:%s31]
    %s55 = sshllo.u32 0, 4
    %s56 = smul.addr 4, 4
    %s57 = scalar_lea.vmem %s1, %s56
    %58 = vst [vmem:[%s57] sm:%s55] %v54
    %s59 = scalar_lea.vmem [#allocation0], 40
    %v60 = vld [vmem:[%s59] sm:%s31]
    %s61 = sshllo.u32 0, 4
    %s62 = smul.addr 4, 5
    %s63 = scalar_lea.vmem %s1, %s62
    %64 = vst [vmem:[%s63] sm:%s61] %v60
    %s65 = scalar_lea.vmem [#allocation0], 48
    %v66 = vld [vmem:[%s65] sm:%s31]
    %s67 = sshllo.u32 0, 4
    %s68 = smul.addr 4, 6
    %s69 = scalar_lea.vmem %s1, %s68
    %70 = vst [vmem:[%s69] sm:%s67] %v66
    %s71 = scalar_lea.vmem [#allocation0], 56
    %v72 = vld [vmem:[%s71] sm:%s31]
    %s73 = sshllo.u32 0, 4
    %s74 = smul.addr 4, 7
    %s75 = scalar_lea.vmem %s1, %s74
    %76 = vst [vmem:[%s75] sm:%s73] %v72

// kernel: mul.29
$region0: #{mul.29}
  %s0 = inlined_call_operand.vmem [shape: f32[4,8,32], index: 0, kind: input, shape index: {}]
  %s1 = inlined_call_operand.vmem [shape: f32[4,8,4,8], index: 1, kind: output, shape index: {}]
  $region1: #{mul.29} parent=0
    #allocation0 [shape = 'u8[131072]{0}', space=vmem, size = 0x20000, scoped, tag = 'scoped mem for output reshape']
    %v2 = vld [vmem:[%s0] sm:$0xff]
    %vm3 = vcmask 64512
    %4 = vst.msk [vmem:[#allocation0] ss:$8 sm:$0xf] %vm3, %v2
    %5 = vst.msk [vmem:[#allocation0] ss:$8 sm:$0xf0] %vm3, %v2
    %s6 = scalar_lea.vmem %s0, 8
    %v7 = vld [vmem:[%s6] sm:$0xff]
    %vm8 = vcmask 64512
    %s9 = scalar_lea.vmem [#allocation0], 64
    %10 = vst.msk [vmem:[%s9] ss:$8 sm:$0xf] %vm8, %v7
    %s11 = scalar_lea.vmem [#allocation0], 64
    %12 = vst.msk [vmem:[%s11] ss:$8 sm:$0xf0] %vm8, %v7
    %s13 = scalar_lea.vmem %s0, 16
    %v14 = vld [vmem:[%s13] sm:$0xff]
    %vm15 = vcmask 64512
    %s16 = scalar_lea.vmem [#allocation0], 128
    %17 = vst.msk [vmem:[%s16] ss:$8 sm:$0xf] %vm15, %v14
    %s18 = scalar_lea.vmem [#allocation0], 128
    %19 = vst.msk [vmem:[%s18] ss:$8 sm:$0xf0] %vm15, %v14
    %s20 = scalar_lea.vmem %s0, 24
    %v21 = vld [vmem:[%s20] sm:$0xff]
    %vm22 = vcmask 64512
    %s23 = scalar_lea.vmem [#allocation0], 192
    %24 = vst.msk [vmem:[%s23] ss:$8 sm:$0xf] %vm22, %v21
    %s25 = scalar_lea.vmem [#allocation0], 192
    %26 = vst.msk [vmem:[%s25] ss:$8 sm:$0xf0] %vm22, %v21
    %v27 = vld [vmem:[%s0] sm:$0xff]
    %28 = vrot.lane.b32.xlu0 %v27, 120
    %v29 = vpop.permute.xlu0 %28
    %vm30 = vcmask 64512
    %s31 = scalar_lea.vmem [#allocation0], 1
    %32 = vst.msk [vmem:[%s31] ss:$8 sm:$0xf] %vm30, %v29
    %s33 = scalar_lea.vmem [#allocation0], 1
    %34 = vst.msk [vmem:[%s33] ss:$8 sm:$0xf0] %vm30, %v29
    %s35 = scalar_lea.vmem %s0, 8
    %v36 = vld [vmem:[%s35] sm:$0xff]
    %37 = vrot.lane.b32.xlu0 %v36, 120
    %v38 = vpop.permute.xlu0 %37
    %vm39 = vcmask 64512
    %s40 = scalar_lea.vmem [#allocation0], 65
    %41 = vst.msk [vmem:[%s40] ss:$8 sm:$0xf] %vm39, %v38
    %s42 = scalar_lea.vmem [#allocation0], 65
    %43 = vst.msk [vmem:[%s42] ss:$8 sm:$0xf0] %vm39, %v38
    %s44 = scalar_lea.vmem %s0, 16
    %v45 = vld [vmem:[%s44] sm:$0xff]
    %46 = vrot.lane.b32.xlu0 %v45, 120
    %v47 = vpop.permute.xlu0 %46
    %vm48 = vcmask 64512
    %s49 = scalar_lea.vmem [#allocation0], 129
    %50 = vst.msk [vmem:[%s49] ss:$8 sm:$0xf] %vm48, %v47
    %s51 = scalar_lea.vmem [#allocation0], 129
    %52 = vst.msk [vmem:[%s51] ss:$8 sm:$0xf0] %vm48, %v47
    %s53 = scalar_lea.vmem %s0, 24
    %v54 = vld [vmem:[%s53] sm:$0xff]
    %55 = vrot.lane.b32.xlu0 %v54, 120
    %v56 = vpop.permute.xlu0 %55
    %vm57 = vcmask 64512
    %s58 = scalar_lea.vmem [#allocation0], 193
    %59 = vst.msk [vmem:[%s58] ss:$8 sm:$0xf] %vm57, %v56
    %s60 = scalar_lea.vmem [#allocation0], 193
    %61 = vst.msk [vmem:[%s60] ss:$8 sm:$0xf0] %vm57, %v56
    %v62 = vld [vmem:[%s0] sm:$0xff]
    %63 = vrot.lane.b32.xlu0 %v62, 112
    %v64 = vpop.permute.xlu0 %63
    %vm65 = vcmask 64512
    %s66 = scalar_lea.vmem [#allocation0], 2
    %67 = vst.msk [vmem:[%s66] ss:$8 sm:$0xf] %vm65, %v64
    %s68 = scalar_lea.vmem [#allocation0], 2
    %69 = vst.msk [vmem:[%s68] ss:$8 sm:$0xf0] %vm65, %v64
    %s70 = scalar_lea.vmem %s0, 8
    %v71 = vld [vmem:[%s70] sm:$0xff]
    %72 = vrot.lane.b32.xlu0 %v71, 112
    %v73 = vpop.permute.xlu0 %72
    %vm74 = vcmask 64512
    %s75 = scalar_lea.vmem [#allocation0], 66
    %76 = vst.msk [vmem:[%s75] ss:$8 sm:$0xf] %vm74, %v73
    %s77 = scalar_lea.vmem [#allocation0], 66
    %78 = vst.msk [vmem:[%s77] ss:$8 sm:$0xf0] %vm74, %v73
    %s79 = scalar_lea.vmem %s0, 16
    %v80 = vld [vmem:[%s79] sm:$0xff]
    %81 = vrot.lane.b32.xlu0 %v80, 112
    %v82 = vpop.permute.xlu0 %81
    %vm83 = vcmask 64512
    %s84 = scalar_lea.vmem [#allocation0], 130
    %85 = vst.msk [vmem:[%s84] ss:$8 sm:$0xf] %vm83, %v82
    %s86 = scalar_lea.vmem [#allocation0], 130
    %87 = vst.msk [vmem:[%s86] ss:$8 sm:$0xf0] %vm83, %v82
    %s88 = scalar_lea.vmem %s0, 24
    %v89 = vld [vmem:[%s88] sm:$0xff]
    %90 = vrot.lane.b32.xlu0 %v89, 112
    %v91 = vpop.permute.xlu0 %90
    %vm92 = vcmask 64512
    %s93 = scalar_lea.vmem [#allocation0], 194
    %94 = vst.msk [vmem:[%s93] ss:$8 sm:$0xf] %vm92, %v91
    %s95 = scalar_lea.vmem [#allocation0], 194
    %96 = vst.msk [vmem:[%s95] ss:$8 sm:$0xf0] %vm92, %v91
    %v97 = vld [vmem:[%s0] sm:$0xff]
    %98 = vrot.lane.b32.xlu0 %v97, 104
    %v99 = vpop.permute.xlu0 %98
    %vm100 = vcmask 64512
    %s101 = scalar_lea.vmem [#allocation0], 3
    %102 = vst.msk [vmem:[%s101] ss:$8 sm:$0xf] %vm100, %v99
    %s103 = scalar_lea.vmem [#allocation0], 3
    %104 = vst.msk [vmem:[%s103] ss:$8 sm:$0xf0] %vm100, %v99
    %s105 = scalar_lea.vmem %s0, 8
    %v106 = vld [vmem:[%s105] sm:$0xff]
    %107 = vrot.lane.b32.xlu0 %v106, 104
    %v108 = vpop.permute.xlu0 %107
    %vm109 = vcmask 64512
    %s110 = scalar_lea.vmem [#allocation0], 67
    %111 = vst.msk [vmem:[%s110] ss:$8 sm:$0xf] %vm109, %v108
    %s112 = scalar_lea.vmem [#allocation0], 67
    %113 = vst.msk [vmem:[%s112] ss:$8 sm:$0xf0] %vm109, %v108
    %s114 = scalar_lea.vmem %s0, 16
    %v115 = vld [vmem:[%s114] sm:$0xff]
    %116 = vrot.lane.b32.xlu0 %v115, 104
    %v117 = vpop.permute.xlu0 %116
    %vm118 = vcmask 64512
    %s119 = scalar_lea.vmem [#allocation0], 131
    %120 = vst.msk [vmem:[%s119] ss:$8 sm:$0xf] %vm118, %v117
    %s121 = scalar_lea.vmem [#allocation0], 131
    %122 = vst.msk [vmem:[%s121] ss:$8 sm:$0xf0] %vm118, %v117
    %s123 = scalar_lea.vmem %s0, 24
    %v124 = vld [vmem:[%s123] sm:$0xff]
    %125 = vrot.lane.b32.xlu0 %v124, 104
    %v126 = vpop.permute.xlu0 %125
    %vm127 = vcmask 64512
    %s128 = scalar_lea.vmem [#allocation0], 195
    %129 = vst.msk [vmem:[%s128] ss:$8 sm:$0xf] %vm127, %v126
    %s130 = scalar_lea.vmem [#allocation0], 195
    %131 = vst.msk [vmem:[%s130] ss:$8 sm:$0xf0] %vm127, %v126
    %s133 = sshllo.u32 0, 4
    %v135 = vld [vmem:[#allocation0] sm:%s133]
    %s136 = sshllo.u32 0, 4
    %137 = vst [vmem:[%s1] sm:%s136] %v135
    %s138 = scalar_lea.vmem [#allocation0], 8
    %v139 = vld [vmem:[%s138] sm:%s133]
    %s140 = sshllo.u32 0, 4
    %s141 = scalar_lea.vmem %s1, 4
    %142 = vst [vmem:[%s141] sm:%s140] %v139
    %s143 = scalar_lea.vmem [#allocation0], 16
    %v144 = vld [vmem:[%s143] sm:%s133]
    %s145 = sshllo.u32 0, 4
    %s146 = smul.addr 4, 2
    %s147 = scalar_lea.vmem %s1, %s146
    %148 = vst [vmem:[%s147] sm:%s145] %v144
    %s149 = scalar_lea.vmem [#allocation0], 24
    %v150 = vld [vmem:[%s149] sm:%s133]
    %s151 = sshllo.u32 0, 4
    %s152 = smul.addr 4, 3
    %s153 = scalar_lea.vmem %s1, %s152
    %154 = vst [vmem:[%s153] sm:%s151] %v150
    %s155 = scalar_lea.vmem [#allocation0], 32
    %v156 = vld [vmem:[%s155] sm:%s133]
    %s157 = sshllo.u32 0, 4
    %s158 = smul.addr 4, 4
    %s159 = scalar_lea.vmem %s1, %s158
    %160 = vst [vmem:[%s159] sm:%s157] %v156
    %s161 = scalar_lea.vmem [#allocation0], 40
    %v162 = vld [vmem:[%s161] sm:%s133]
    %s163 = sshllo.u32 0, 4
    %s164 = smul.addr 4, 5
    %s165 = scalar_lea.vmem %s1, %s164
    %166 = vst [vmem:[%s165] sm:%s163] %v162
    %s167 = scalar_lea.vmem [#allocation0], 48
    %v168 = vld [vmem:[%s167] sm:%s133]
    %s169 = sshllo.u32 0, 4
    %s170 = smul.addr 4, 6
    %s171 = scalar_lea.vmem %s1, %s170
    %172 = vst [vmem:[%s171] sm:%s169] %v168
    %s173 = scalar_lea.vmem [#allocation0], 56
    %v174 = vld [vmem:[%s173] sm:%s133]
    %s175 = sshllo.u32 0, 4
    %s176 = smul.addr 4, 7
    %s177 = scalar_lea.vmem %s1, %s176
    %178 = vst [vmem:[%s177] sm:%s175] %v174
    %s179 = scalar_lea.vmem [#allocation0], 64
    %v180 = vld [vmem:[%s179] sm:%s133]
    %s181 = sshllo.u32 0, 4
    %s182 = smul.addr 4, 8
    %s183 = scalar_lea.vmem %s1, %s182
    %184 = vst [vmem:[%s183] sm:%s181] %v180
    %s185 = scalar_lea.vmem [#allocation0], 72
    %v186 = vld [vmem:[%s185] sm:%s133]
    %s187 = sshllo.u32 0, 4
    %s188 = smul.addr 4, 9
    %s189 = scalar_lea.vmem %s1, %s188
    %190 = vst [vmem:[%s189] sm:%s187] %v186
    %s191 = scalar_lea.vmem [#allocation0], 80
    %v192 = vld [vmem:[%s191] sm:%s133]
    %s193 = sshllo.u32 0, 4
    %s194 = smul.addr 4, 10
    %s195 = scalar_lea.vmem %s1, %s194
    %196 = vst [vmem:[%s195] sm:%s193] %v192
    %s197 = scalar_lea.vmem [#allocation0], 88
    %v198 = vld [vmem:[%s197] sm:%s133]
    %s199 = sshllo.u32 0, 4
    %s200 = smul.addr 4, 11
    %s201 = scalar_lea.vmem %s1, %s200
    %202 = vst [vmem:[%s201] sm:%s199] %v198
    %s203 = scalar_lea.vmem [#allocation0], 96
    %v204 = vld [vmem:[%s203] sm:%s133]
    %s205 = sshllo.u32 0, 4
    %s206 = smul.addr 4, 12
    %s207 = scalar_lea.vmem %s1, %s206
    %208 = vst [vmem:[%s207] sm:%s205] %v204
    %s209 = scalar_lea.vmem [#allocation0], 104
    %v210 = vld [vmem:[%s209] sm:%s133]
    %s211 = sshllo.u32 0, 4
    %s212 = smul.addr 4, 13
    %s213 = scalar_lea.vmem %s1, %s212
    %214 = vst [vmem:[%s213] sm:%s211] %v210
    %s215 = scalar_lea.vmem [#allocation0], 112
    %v216 = vld [vmem:[%s215] sm:%s133]
    %s217 = sshllo.u32 0, 4
    %s218 = smul.addr 4, 14
    %s219 = scalar_lea.vmem %s1, %s218
    %220 = vst [vmem:[%s219] sm:%s217] %v216
    %s221 = scalar_lea.vmem [#allocation0], 120
    %v222 = vld [vmem:[%s221] sm:%s133]
    %s223 = sshllo.u32 0, 4
    %s224 = smul.addr 4, 15
    %s225 = scalar_lea.vmem %s1, %s224
    %226 = vst [vmem:[%s225] sm:%s223] %v222
    %s227 = scalar_lea.vmem [#allocation0], 128
    %v228 = vld [vmem:[%s227] sm:%s133]
    %s229 = sshllo.u32 0, 4
    %s230 = smul.addr 4, 16
    %s231 = scalar_lea.vmem %s1, %s230
    %232 = vst [vmem:[%s231] sm:%s229] %v228
    %s233 = scalar_lea.vmem [#allocation0], 136
    %v234 = vld [vmem:[%s233] sm:%s133]
    %s235 = sshllo.u32 0, 4
    %s236 = smul.addr 4, 17
    %s237 = scalar_lea.vmem %s1, %s236
    %238 = vst [vmem:[%s237] sm:%s235] %v234
    %s239 = scalar_lea.vmem [#allocation0], 144
    %v240 = vld [vmem:[%s239] sm:%s133]
    %s241 = sshllo.u32 0, 4
    %s242 = smul.addr 4, 18
    %s243 = scalar_lea.vmem %s1, %s242
    %244 = vst [vmem:[%s243] sm:%s241] %v240
    %s245 = scalar_lea.vmem [#allocation0], 152
    %v246 = vld [vmem:[%s245] sm:%s133]
    %s247 = sshllo.u32 0, 4
    %s248 = smul.addr 4, 19
    %s249 = scalar_lea.vmem %s1, %s248
    %250 = vst [vmem:[%s249] sm:%s247] %v246
    %s251 = scalar_lea.vmem [#allocation0], 160
    %v252 = vld [vmem:[%s251] sm:%s133]
    %s253 = sshllo.u32 0, 4
    %s254 = smul.addr 4, 20
    %s255 = scalar_lea.vmem %s1, %s254
    %256 = vst [vmem:[%s255] sm:%s253] %v252
    %s257 = scalar_lea.vmem [#allocation0], 168
    %v258 = vld [vmem:[%s257] sm:%s133]
    %s259 = sshllo.u32 0, 4
    %s260 = smul.addr 4, 21
    %s261 = scalar_lea.vmem %s1, %s260
    %262 = vst [vmem:[%s261] sm:%s259] %v258
    %s263 = scalar_lea.vmem [#allocation0], 176
    %v264 = vld [vmem:[%s263] sm:%s133]
    %s265 = sshllo.u32 0, 4
    %s266 = smul.addr 4, 22
    %s267 = scalar_lea.vmem %s1, %s266
    %268 = vst [vmem:[%s267] sm:%s265] %v264
    %s269 = scalar_lea.vmem [#allocation0], 184
    %v270 = vld [vmem:[%s269] sm:%s133]
    %s271 = sshllo.u32 0, 4
    %s272 = smul.addr 4, 23
    %s273 = scalar_lea.vmem %s1, %s272
    %274 = vst [vmem:[%s273] sm:%s271] %v270
    %s275 = scalar_lea.vmem [#allocation0], 192
    %v276 = vld [vmem:[%s275] sm:%s133]
    %s277 = sshllo.u32 0, 4
    %s278 = smul.addr 4, 24
    %s279 = scalar_lea.vmem %s1, %s278
    %280 = vst [vmem:[%s279] sm:%s277] %v276
    %s281 = scalar_lea.vmem [#allocation0], 200
    %v282 = vld [vmem:[%s281] sm:%s133]
    %s283 = sshllo.u32 0, 4
    %s284 = smul.addr 4, 25
    %s285 = scalar_lea.vmem %s1, %s284
    %286 = vst [vmem:[%s285] sm:%s283] %v282
    %s287 = scalar_lea.vmem [#allocation0], 208
    %v288 = vld [vmem:[%s287] sm:%s133]
    %s289 = sshllo.u32 0, 4
    %s290 = smul.addr 4, 26
    %s291 = scalar_lea.vmem %s1, %s290
    %292 = vst [vmem:[%s291] sm:%s289] %v288
    %s293 = scalar_lea.vmem [#allocation0], 216
    %v294 = vld [vmem:[%s293] sm:%s133]
    %s295 = sshllo.u32 0, 4
    %s296 = smul.addr 4, 27
    %s297 = scalar_lea.vmem %s1, %s296
    %298 = vst [vmem:[%s297] sm:%s295] %v294
    %s299 = scalar_lea.vmem [#allocation0], 224
    %v300 = vld [vmem:[%s299] sm:%s133]
    %s301 = sshllo.u32 0, 4
    %s302 = smul.addr 4, 28
    %s303 = scalar_lea.vmem %s1, %s302
    %304 = vst [vmem:[%s303] sm:%s301] %v300
    %s305 = scalar_lea.vmem [#allocation0], 232
    %v306 = vld [vmem:[%s305] sm:%s133]
    %s307 = sshllo.u32 0, 4
    %s308 = smul.addr 4, 29
    %s309 = scalar_lea.vmem %s1, %s308
    %310 = vst [vmem:[%s309] sm:%s307] %v306
    %s311 = scalar_lea.vmem [#allocation0], 240
    %v312 = vld [vmem:[%s311] sm:%s133]
    %s313 = sshllo.u32 0, 4
    %s314 = smul.addr 4, 30
    %s315 = scalar_lea.vmem %s1, %s314
    %316 = vst [vmem:[%s315] sm:%s313] %v312
    %s317 = scalar_lea.vmem [#allocation0], 248
    %v318 = vld [vmem:[%s317] sm:%s133]
    %s319 = sshllo.u32 0, 4
    %s320 = smul.addr 4, 31
    %s321 = scalar_lea.vmem %s1, %s320
    %322 = vst [vmem:[%s321] sm:%s319] %v318

// kernel: tile.13
$region0: #{tile.13}
  #allocation0 [shape = 's32[1]{0}', space=sflag, size = 0x4, scoped, tag = 'scoped memory for tile.13']
  %s0 = inlined_call_operand.vmem [shape: f32[8], index: 0, kind: input, shape index: {}]
  %s1 = inlined_call_operand.vmem [shape: f32[4,8], index: 1, kind: output, shape index: {}]
  // Predicated region
  $region2: #{tile.13} parent=0 // pred_check
    _
  $region3: #{tile.13} parent=0 // pred_check_branch
    %3 = sbr.rel (0) target = $region5
  $region4: #{tile.13} parent=0 // pred_region
    _
  $region5: #{tile.13} parent=0 // pred_fallthru
    _
  %v4 = vld [vmem:[%s0] ss:$0 sm:$0xff]
  %5 = vst [vmem:[%s1] sm:$0xf] %v4

// kernel: tile.14
$region0: #{tile.14}
  %s0 = inlined_call_operand.vmem [shape: f32[4,8], index: 0, kind: input, shape index: {}]
  %s1 = inlined_call_operand.vmem [shape: f32[1,32], index: 1, kind: output, shape index: {}]
  $region1: #{tile.14} parent=0
    #allocation0 [shape = 'u8[4096]{0}', space=vmem, size = 0x1000, scoped, tag = 'scoped mem for output reshape']
    #allocation1 [shape = 'u8[4096]{0}', space=vmem, size = 0x1000, scoped, tag = 'scoped mem for input reshape']
    %s3 = sshllo.u32 0, 4
    %v4 = vld [vmem:[%s0] sm:%s3]
    %5 = vst [vmem:[#allocation1] sm:%s3] %v4
    %v6 = vld [vmem:[#allocation1] sm:$0x1]
    %vm7 = vcmask 64512
    %8 = vst.msk [vmem:[#allocation0] sm:$0x1] %vm7, %v6
    %s9 = scalar_lea.vmem [#allocation1], 3
    %v10 = vld [vmem:[%s9] sm:$0x1]
    %11 = vrot.lane.b32.xlu0 %v10, 24
    %v12 = vpop.permute.xlu0 %11
    %vm13 = vcmask 261312
    %14 = vst.msk [vmem:[#allocation0] sm:$0x1] %vm13, %v12
    %s15 = scalar_lea.vmem [#allocation1], 2
    %v16 = vld [vmem:[%s15] sm:$0x1]
    %17 = vrot.lane.b32.xlu0 %v16, 16
    %v18 = vpop.permute.xlu0 %17
    %vm19 = vcmask 195712
    %20 = vst.msk [vmem:[#allocation0] sm:$0x1] %vm19, %v18
    %s21 = scalar_lea.vmem [#allocation1], 1
    %v22 = vld [vmem:[%s21] sm:$0x1]
    %23 = vrot.lane.b32.xlu0 %v22, 8
    %v24 = vpop.permute.xlu0 %23
    %vm25 = vcmask 130112
    %26 = vst.msk [vmem:[#allocation0] sm:$0x1] %vm25, %v24
    %s28 = sshllo.u32 0, 1
    %v30 = vld [vmem:[#allocation0] sm:%s28]
    %s31 = sshllo.u32 0, 1
    %32 = vst [vmem:[%s1] sm:%s31] %v30

// kernel: slstm_block_forward.1
$region0: #{slstm_block_forward.1}
  #allocation0 [shape = 'u32[]', space=smem, size = 0x4, offset = 0x4, fixed_abs, tag = 'smem constant byte address 0x4 - core index']
  #allocation1 [shape = 'u32[144,128]{1,0:T(1,128)}', space=vmem, size = 0x12000, scoped, tag = 'internal scratch']
  #allocation2 [shape = 'f32[16,128]{1,0:T(8,128)}', space=vmem, size = 0x2000, scoped, tag = 'scratch operand']
  #allocation3 [shape = 'f32[16,32]{1,0:T(8,128)}', space=vmem, size = 0x2000, scoped, tag = 'scratch operand']
  %s0 = inlined_call_operand.vmem [shape: f32[16,32], index: 0, kind: input, shape index: {}]
  %s1 = inlined_call_operand.vmem [shape: f32[1,32], index: 1, kind: input, shape index: {}]
  %s2 = inlined_call_operand.vmem [shape: f32[1,32], index: 2, kind: input, shape index: {}]
  %s3 = inlined_call_operand.vmem [shape: f32[32,128], index: 3, kind: input, shape index: {}]
  %s4 = inlined_call_operand.vmem [shape: f32[1,128], index: 4, kind: input, shape index: {}]
  %s5 = inlined_call_operand.vmem [shape: f32[32,128], index: 5, kind: input, shape index: {}]
  %s6 = inlined_call_operand.vmem [shape: f32[32,32], index: 6, kind: input, shape index: {}]
  %s7 = inlined_call_operand.vmem [shape: f32[1,32], index: 7, kind: input, shape index: {}]
  %s8 = inlined_call_operand.vmem [shape: f32[1,32], index: 8, kind: input, shape index: {}]
  %s9 = inlined_call_operand.vmem [shape: f32[1,32], index: 9, kind: input, shape index: {}]
  %s10 = inlined_call_operand.vmem [shape: f32[1,32], index: 10, kind: input, shape index: {}]
  %s11 = inlined_call_operand.vmem [shape: f32[32,128], index: 11, kind: input, shape index: {}]
  %s12 = inlined_call_operand.vmem [shape: f32[1,128], index: 12, kind: input, shape index: {}]
  %s13 = inlined_call_operand.vmem [shape: f32[64,32], index: 13, kind: input, shape index: {}]
  %s14 = inlined_call_operand.vmem [shape: f32[1,32], index: 14, kind: input, shape index: {}]
  %s15 = inlined_call_operand.vmem [shape: f32[16,32], index: 15, kind: output, shape index: {}]
  %s16 = sld [smem:[#allocation0]]
  $region70: #{slstm_block_forward.1} parent=0
    _
  %s18 = ssub.s32 1, %s16
  %s19 = scalar_select 0, %s18, %s16
  // Predicated region
  $region2: #{slstm_block_forward.1} parent=0 // pred_check
    _
  $region3: #{slstm_block_forward.1} parent=0 // pred_check_branch
    %21 = sbr.rel (0) target = $region5
  $region4: #{slstm_block_forward.1} parent=0 // pred_region
    _
  $region5: #{slstm_block_forward.1} parent=0 // pred_fallthru
    _
  // Predicated region
  $region6: #{slstm_block_forward.1} parent=0 // pred_check
    _
  $region7: #{slstm_block_forward.1} parent=0 // pred_check_branch
    %23 = sbr.rel (0) target = $region9
  $region8: #{slstm_block_forward.1} parent=0 // pred_region
    _
  $region9: #{slstm_block_forward.1} parent=0 // pred_fallthru
    _
  // Predicated region
  $region10: #{slstm_block_forward.1} parent=0 // pred_check
    _
  $region11: #{slstm_block_forward.1} parent=0 // pred_check_branch
    %25 = sbr.rel (0) target = $region13
  $region12: #{slstm_block_forward.1} parent=0 // pred_region
    _
  $region13: #{slstm_block_forward.1} parent=0 // pred_fallthru
    _
  // Predicated region
  $region14: #{slstm_block_forward.1} parent=0 // pred_check
    _
  $region15: #{slstm_block_forward.1} parent=0 // pred_check_branch
    %27 = sbr.rel (0) target = $region17
  $region16: #{slstm_block_forward.1} parent=0 // pred_region
    _
  $region17: #{slstm_block_forward.1} parent=0 // pred_fallthru
    _
  // Predicated region
  $region18: #{slstm_block_forward.1} parent=0 // pred_check
    _
  $region19: #{slstm_block_forward.1} parent=0 // pred_check_branch
    %29 = sbr.rel (0) target = $region21
  $region20: #{slstm_block_forward.1} parent=0 // pred_region
    _
  $region21: #{slstm_block_forward.1} parent=0 // pred_fallthru
    _
  // Predicated region
  $region22: #{slstm_block_forward.1} parent=0 // pred_check
    _
  $region23: #{slstm_block_forward.1} parent=0 // pred_check_branch
    %31 = sbr.rel (0) target = $region25
  $region24: #{slstm_block_forward.1} parent=0 // pred_region
    _
  $region25: #{slstm_block_forward.1} parent=0 // pred_fallthru
    _
  // Predicated region
  $region26: #{slstm_block_forward.1} parent=0 // pred_check
    _
  $region27: #{slstm_block_forward.1} parent=0 // pred_check_branch
    %33 = sbr.rel (0) target = $region29
  $region28: #{slstm_block_forward.1} parent=0 // pred_region
    _
  $region29: #{slstm_block_forward.1} parent=0 // pred_fallthru
    _
  // Predicated region
  $region30: #{slstm_block_forward.1} parent=0 // pred_check
    _
  $region31: #{slstm_block_forward.1} parent=0 // pred_check_branch
    %35 = sbr.rel (0) target = $region33
  $region32: #{slstm_block_forward.1} parent=0 // pred_region
    _
  $region33: #{slstm_block_forward.1} parent=0 // pred_fallthru
    _
  // Predicated region
  $region34: #{slstm_block_forward.1} parent=0 // pred_check
    _
  $region35: #{slstm_block_forward.1} parent=0 // pred_check_branch
    %37 = sbr.rel (0) target = $region37
  $region36: #{slstm_block_forward.1} parent=0 // pred_region
    _
  $region37: #{slstm_block_forward.1} parent=0 // pred_fallthru
    _
  // Predicated region
  $region38: #{slstm_block_forward.1} parent=0 // pred_check
    _
  $region39: #{slstm_block_forward.1} parent=0 // pred_check_branch
    %39 = sbr.rel (0) target = $region41
  $region40: #{slstm_block_forward.1} parent=0 // pred_region
    _
  $region41: #{slstm_block_forward.1} parent=0 // pred_fallthru
    _
  // Predicated region
  $region42: #{slstm_block_forward.1} parent=0 // pred_check
    _
  $region43: #{slstm_block_forward.1} parent=0 // pred_check_branch
    %41 = sbr.rel (0) target = $region45
  $region44: #{slstm_block_forward.1} parent=0 // pred_region
    _
  $region45: #{slstm_block_forward.1} parent=0 // pred_fallthru
    _
  // Predicated region
  $region46: #{slstm_block_forward.1} parent=0 // pred_check
    _
  $region47: #{slstm_block_forward.1} parent=0 // pred_check_branch
    %43 = sbr.rel (0) target = $region49
  $region48: #{slstm_block_forward.1} parent=0 // pred_region
    _
  $region49: #{slstm_block_forward.1} parent=0 // pred_fallthru
    _
  // Predicated region
  $region50: #{slstm_block_forward.1} parent=0 // pred_check
    _
  $region51: #{slstm_block_forward.1} parent=0 // pred_check_branch
    %45 = sbr.rel (0) target = $region53
  $region52: #{slstm_block_forward.1} parent=0 // pred_region
    _
  $region53: #{slstm_block_forward.1} parent=0 // pred_fallthru
    _
  // Predicated region
  $region54: #{slstm_block_forward.1} parent=0 // pred_check
    _
  $region55: #{slstm_block_forward.1} parent=0 // pred_check_branch
    %47 = sbr.rel (0) target = $region57
  $region56: #{slstm_block_forward.1} parent=0 // pred_region
    _
  $region57: #{slstm_block_forward.1} parent=0 // pred_fallthru
    _
  // Predicated region
  $region58: #{slstm_block_forward.1} parent=0 // pred_check
    _
  $region59: #{slstm_block_forward.1} parent=0 // pred_check_branch
    %49 = sbr.rel (0) target = $region61
  $region60: #{slstm_block_forward.1} parent=0 // pred_region
    _
  $region61: #{slstm_block_forward.1} parent=0 // pred_fallthru
    _
  %v50 = vld [vmem:[%s0] sm:$0xff]
  %v51 = vld [vmem:[%s0 + $0x8] sm:$0xff]
  %vm52 = vcmask 261120
  %v53 = vsel %vm52, %v50, 0.0
  %54 = vadd.xlane.f32.xlu0 %v53
  %v55 = vpop.xlane.xlu0 %54
  %v56 = vsel %vm52, %v51, 0.0
  %57 = vadd.xlane.f32.xlu0 %v56
  %v58 = vpop.xlane.xlu0 %57
  %v59 = vrcp.pop 32.0
  %v60 = vmul.f32 %v55, %v59
  %v61 = vmul.f32 %v58, %v59
  %v62 = vsub.f32 %v50, %v60
  %v63 = vsub.f32 %v51, %v61
  %v64 = vmul.f32 %v62, %v62
  %v65 = vmul.f32 %v63, %v63
  %v66 = vsel %vm52, %v64, 0.0
  %67 = vadd.xlane.f32.xlu0 %v66
  %v68 = vpop.xlane.xlu0 %67
  %v69 = vsel %vm52, %v65, 0.0
  %70 = vadd.xlane.f32.xlu0 %v69
  %v71 = vpop.xlane.xlu0 %70
  %v72 = vmul.f32 %v68, %v59
  %v73 = vmul.f32 %v71, %v59
  %v74 = vadd.f32 %v72, 1e-05
  %v75 = vadd.f32 %v73, 1e-05
  %v76 = vrsqrt.pop %v74
  %v77 = vrsqrt.pop %v75
  %v78 = vmul.f32 %v62, %v76
  %v79 = vmul.f32 %v63, %v77
  %v80 = vld [vmem:[%s1] sm:$0x1]
  %v82 = vlaneseq
  %v83 = vshrl.u32 %v82, 7
  %v84 = vsub.s32 0, %v83
  %v85 = vrot.slane %v80, %v84
  %v87 = vmul.f32 %v78, %v85
  %v88 = vmul.f32 %v79, %v85
  %v89 = vld [vmem:[%s2] sm:$0x1]
  %v91 = vlaneseq
  %v92 = vshrl.u32 %v91, 7
  %v93 = vsub.s32 0, %v92
  %v94 = vrot.slane %v89, %v93
  %v96 = vadd.f32 %v87, %v94
  %v97 = vadd.f32 %v88, %v94
  %v98 = vld [vmem:[%s3] sm:$0xff]
  %v99 = vld [vmem:[%s3 + $0x8] sm:$0xff]
  %v100 = vld [vmem:[%s3 + $0x10] sm:$0xff]
  %v101 = vld [vmem:[%s3 + $0x18] sm:$0xff]
  %v102 = vld [vmem:[%s4] sm:$0x1]
  %v104 = vlaneseq
  %v105 = vshrl.u32 %v104, 7
  %v106 = vsub.s32 0, %v105
  %v107 = vrot.slane %v102, %v106
  %v110 = vsel %vm52, %v96, 0
  %v113 = vsel %vm52, %v97, 0
  %115 = vmatprep.subr.mxu0 0.0
  %116 = vmatpush1.msra.mxu0 %v98
  %117 = vmatprep.subr.mxu0 0.0
  %118 = vmatpush1.msra.mxu0 %v99
  %119 = vmatprep.subr.mxu0 0.0
  %120 = vmatpush1.msra.mxu0 %v100
  %121 = vmatprep.subr.mxu0 0.0
  %122 = vmatpush1.msra.mxu0 %v101
  %123 = vmatprep.subr.mxu0 0.0
  %124 = vmatpush1.msra.mxu0 0.0
  %125 = vmatprep.subr.mxu0 0.0
  %126 = vmatpush1.msra.mxu0 0.0
  %127 = vmatprep.subr.mxu0 0.0
  %128 = vmatpush1.msra.mxu0 0.0
  %129 = vmatprep.subr.mxu0 0.0
  %130 = vmatpush1.msra.mxu0 0.0
  %131 = vmatprep.subr.mxu0 0.0
  %132 = vmatpush1.msra.mxu0 0.0
  %133 = vmatprep.subr.mxu0 0.0
  %134 = vmatpush1.msra.mxu0 0.0
  %135 = vmatprep.subr.mxu0 0.0
  %136 = vmatpush1.msra.mxu0 0.0
  %137 = vmatprep.subr.mxu0 0.0
  %138 = vmatpush1.msra.mxu0 0.0
  %139 = vmatprep.subr.mxu0 0.0
  %140 = vmatpush1.msra.mxu0 0.0
  %141 = vmatprep.subr.mxu0 0.0
  %142 = vmatpush1.msra.mxu0 0.0
  %143 = vmatprep.subr.mxu0 0.0
  %144 = vmatpush1.msra.mxu0 0.0
  %145 = vmatprep.subr.mxu0 0.0
  %146 = vmatpush1.msra.mxu0 0.0
  %147 = vmatprep.subr.mxu0 0.0
  %148 = vmatpush1.msra.mxu0 0.0
  %149 = vmatprep.subr.mxu0 0.0
  %150 = vmatpush1.msra.mxu0 0.0
  %151 = vmatprep.subr.mxu0 0.0
  %152 = vmatpush1.msra.mxu0 0.0
  %153 = vmatprep.subr.mxu0 0.0
  %154 = vmatpush1.msra.mxu0 0.0
  %155 = vmatprep.subr.mxu0 0.0
  %156 = vmatpush1.msra.mxu0 0.0
  %157 = vmatprep.subr.mxu0 0.0
  %158 = vmatpush1.msra.mxu0 0.0
  %159 = vmatprep.subr.mxu0 0.0
  %160 = vmatpush1.msra.mxu0 0.0
  %161 = vmatprep.subr.mxu0 0.0
  %162 = vmatpush1.msra.mxu0 0.0
  %163 = vmatprep.subr.mxu0 0.0
  %164 = vmatpush1.msra.mxu0 0.0
  %165 = vmatprep.subr.mxu0 0.0
  %166 = vmatpush1.msra.mxu0 0.0
  %167 = vmatprep.subr.mxu0 0.0
  %168 = vmatpush1.msra.mxu0 0.0
  %169 = vmatprep.subr.mxu0 0.0
  %170 = vmatpush1.msra.mxu0 0.0
  %171 = vmatprep.subr.mxu0 0.0
  %172 = vmatpush1.msra.mxu0 0.0
  %173 = vmatprep.subr.mxu0 0.0
  %174 = vmatpush1.msra.mxu0 0.0
  %175 = vmatprep.subr.mxu0 0.0
  %176 = vmatpush1.msra.mxu0 0.0
  %177 = vmatprep.subr.mxu0 0.0
  %178 = vmatpush1.msra.mxu0 0.0
  %179 = vmatprep.mubr.f32.mxu0 0.0
  %180 = vmatmul.mubr.f32.gmra.mrb[0].mxu0 %v110
  %v181 = vpop.f32.mrb[0].mxu0
  %v182 = vadd.f32 %v107, %v181
  %v183 = vpop.f32.mrb[0].mxu0
  %184 = vmatprep.mubr.f32.mxu0 0.0
  %185 = vmatmul.mubr.f32.gmra.mrb[0].mxu0 %v113
  %v186 = vpop.f32.mrb[0].mxu0
  %v187 = vadd.f32 %v107, %v186
  %v188 = vpop.f32.mrb[0].mxu0
  %189 = vdwg.mxu0
  %190 = vst [vmem:[#allocation2] sm:$0xff] %v182
  %191 = vst [vmem:[#allocation2 + $0x8] sm:$0xff] %v187
  %v192 = vld [vmem:[%s5] sm:$0xff]
  %v193 = vld [vmem:[%s5 + $0x8] sm:$0xff]
  %v194 = vld [vmem:[%s5 + $0x10] sm:$0xff]
  %v195 = vld [vmem:[%s5 + $0x18] sm:$0xff]
  %v196 = vld [vmem:[#allocation2] sm:$0x3]
  %v198 = vsel %vm52, 0.0, 0
  %200 = vmatprep.subr.mxu0 0.0
  %201 = vmatpush1.msra.mxu0 %v192
  %202 = vmatprep.subr.mxu0 0.0
  %203 = vmatpush1.msra.mxu0 %v193
  %204 = vmatprep.subr.mxu0 0.0
  %205 = vmatpush1.msra.mxu0 %v194
  %206 = vmatprep.subr.mxu0 0.0
  %207 = vmatpush1.msra.mxu0 %v195
  %208 = vmatprep.subr.mxu0 0.0
  %209 = vmatpush1.msra.mxu0 0.0
  %210 = vmatprep.subr.mxu0 0.0
  %211 = vmatpush1.msra.mxu0 0.0
  %212 = vmatprep.subr.mxu0 0.0
  %213 = vmatpush1.msra.mxu0 0.0
  %214 = vmatprep.subr.mxu0 0.0
  %215 = vmatpush1.msra.mxu0 0.0
  %216 = vmatprep.subr.mxu0 0.0
  %217 = vmatpush1.msra.mxu0 0.0
  %218 = vmatprep.subr.mxu0 0.0
  %219 = vmatpush1.msra.mxu0 0.0
  %220 = vmatprep.subr.mxu0 0.0
  %221 = vmatpush1.msra.mxu0 0.0
  %222 = vmatprep.subr.mxu0 0.0
  %223 = vmatpush1.msra.mxu0 0.0
  %224 = vmatprep.subr.mxu0 0.0
  %225 = vmatpush1.msra.mxu0 0.0
  %226 = vmatprep.subr.mxu0 0.0
  %227 = vmatpush1.msra.mxu0 0.0
  %228 = vmatprep.subr.mxu0 0.0
  %229 = vmatpush1.msra.mxu0 0.0
  %230 = vmatprep.subr.mxu0 0.0
  %231 = vmatpush1.msra.mxu0 0.0
  %232 = vmatprep.subr.mxu0 0.0
  %233 = vmatpush1.msra.mxu0 0.0
  %234 = vmatprep.subr.mxu0 0.0
  %235 = vmatpush1.msra.mxu0 0.0
  %236 = vmatprep.subr.mxu0 0.0
  %237 = vmatpush1.msra.mxu0 0.0
  %238 = vmatprep.subr.mxu0 0.0
  %239 = vmatpush1.msra.mxu0 0.0
  %240 = vmatprep.subr.mxu0 0.0
  %241 = vmatpush1.msra.mxu0 0.0
  %242 = vmatprep.subr.mxu0 0.0
  %243 = vmatpush1.msra.mxu0 0.0
  %244 = vmatprep.subr.mxu0 0.0
  %245 = vmatpush1.msra.mxu0 0.0
  %246 = vmatprep.subr.mxu0 0.0
  %247 = vmatpush1.msra.mxu0 0.0
  %248 = vmatprep.subr.mxu0 0.0
  %249 = vmatpush1.msra.mxu0 0.0
  %250 = vmatprep.subr.mxu0 0.0
  %251 = vmatpush1.msra.mxu0 0.0
  %252 = vmatprep.subr.mxu0 0.0
  %253 = vmatpush1.msra.mxu0 0.0
  %254 = vmatprep.subr.mxu0 0.0
  %255 = vmatpush1.msra.mxu0 0.0
  %256 = vmatprep.subr.mxu0 0.0
  %257 = vmatpush1.msra.mxu0 0.0
  %258 = vmatprep.subr.mxu0 0.0
  %259 = vmatpush1.msra.mxu0 0.0
  %260 = vmatprep.subr.mxu0 0.0
  %261 = vmatpush1.msra.mxu0 0.0
  %262 = vmatprep.subr.mxu0 0.0
  %263 = vmatpush1.msra.mxu0 0.0
  %264 = vmatprep.mubr.f32.mxu0 0.0
  %265 = vmatmul.mubr.f32.gmra.mrb[0].mxu0 %v198
  %v266 = vpop.f32.mrb[0].mxu0
  %v267 = vadd.f32 0.0, %v266
  %v268 = vpop.f32.mrb[0].mxu0
  %269 = vdwg.mxu0
  %v270 = vadd.f32 %v196, %v267
  %v271 = vtanh.pop %v270
  %v272 = vxor.u32 %v270, 2147483648
  %v273 = vmul.f32 %v272, 1.442695
  %v274 = vpow.pop %v273
  %v275 = vadd.f32 %v274, 1.0
  %v276 = vrcp.pop %v275
  %v277 = vmul.f32 1.0, %v276
  %v278 = vmin.f32 %v270, 0.0
  %v279 = vand.u32 2147483647, %v270
  %v280 = vsub.f32 0.0, %v279
  %v281 = vmul.f32 %v280, 1.442695
  %v282 = vpow.pop %v281
  %v283 = vadd.f32 %v282, 1.0
  %v284 = vlog2.pop %v283
  %v285 = vmul.f32 %v284, 0.6931472
  %v286 = vsub.f32 %v278, %v285
  %v287 = vadd.f32 %v286, -1e+30
  %289 = vrot.lane.b32.xlu0 %v270, 32
  %v290 = vpop.permute.xlu0 %289
  %v292 = vmax.f32 %v287, %v290
  %294 = vrot.lane.b32.xlu0 %v292, 96
  %v295 = vpop.permute.xlu0 %294
  %v297 = vsub.f32 %v270, %v295
  %v298 = vmul.f32 %v297, 1.442695
  %v299 = vpow.pop %v298
  %v300 = vsub.f32 %v287, %v292
  %v301 = vmul.f32 %v300, 1.442695
  %v302 = vpow.pop %v301
  %v303 = vmul.f32 %v302, 0.0
  %305 = vrot.lane.b32.xlu0 %v271, 64
  %v306 = vpop.permute.xlu0 %305
  %v308 = vmul.f32 %v299, %v306
  %310 = vrot.lane.b32.xlu0 %v308, 32
  %v311 = vpop.permute.xlu0 %310
  %v313 = vadd.f32 %v303, %v311
  %315 = vrot.lane.b32.xlu0 %v299, 32
  %v316 = vpop.permute.xlu0 %315
  %v318 = vadd.f32 %v303, %v316
  %v319 = vrcp.pop %v318
  %v320 = vmul.f32 %v313, %v319
  %322 = vrot.lane.b32.xlu0 %v320, 64
  %v323 = vpop.permute.xlu0 %322
  %v325 = vmul.f32 %v277, %v323
  %327 = vrot.lane.b32.xlu0 %v325, 32
  %v328 = vpop.permute.xlu0 %327
  %vm330 = vcmask 254976
  %331 = vst.msk [vmem:[#allocation3] sm:$0x3] %vm330, %v328
  %s332 = scalar_lea.vmem [#allocation2], 2
  %v333 = vld [vmem:[%s332] sm:$0x3]
  %v334 = vsel %vm52, %v328, 0
  %336 = vmatprep.subr.mxu0 0.0
  %337 = vmatpush1.msra.mxu0 %v192
  %338 = vmatprep.subr.mxu0 0.0
  %339 = vmatpush1.msra.mxu0 %v193
  %340 = vmatprep.subr.mxu0 0.0
  %341 = vmatpush1.msra.mxu0 %v194
  %342 = vmatprep.subr.mxu0 0.0
  %343 = vmatpush1.msra.mxu0 %v195
  %344 = vmatprep.subr.mxu0 0.0
  %345 = vmatpush1.msra.mxu0 0.0
  %346 = vmatprep.subr.mxu0 0.0
  %347 = vmatpush1.msra.mxu0 0.0
  %348 = vmatprep.subr.mxu0 0.0
  %349 = vmatpush1.msra.mxu0 0.0
  %350 = vmatprep.subr.mxu0 0.0
  %351 = vmatpush1.msra.mxu0 0.0
  %352 = vmatprep.subr.mxu0 0.0
  %353 = vmatpush1.msra.mxu0 0.0
  %354 = vmatprep.subr.mxu0 0.0
  %355 = vmatpush1.msra.mxu0 0.0
  %356 = vmatprep.subr.mxu0 0.0
  %357 = vmatpush1.msra.mxu0 0.0
  %358 = vmatprep.subr.mxu0 0.0
  %359 = vmatpush1.msra.mxu0 0.0
  %360 = vmatprep.subr.mxu0 0.0
  %361 = vmatpush1.msra.mxu0 0.0
  %362 = vmatprep.subr.mxu0 0.0
  %363 = vmatpush1.msra.mxu0 0.0
  %364 = vmatprep.subr.mxu0 0.0
  %365 = vmatpush1.msra.mxu0 0.0
  %366 = vmatprep.subr.mxu0 0.0
  %367 = vmatpush1.msra.mxu0 0.0
  %368 = vmatprep.subr.mxu0 0.0
  %369 = vmatpush1.msra.mxu0 0.0
  %370 = vmatprep.subr.mxu0 0.0
  %371 = vmatpush1.msra.mxu0 0.0
  %372 = vmatprep.subr.mxu0 0.0
  %373 = vmatpush1.msra.mxu0 0.0
  %374 = vmatprep.subr.mxu0 0.0
  %375 = vmatpush1.msra.mxu0 0.0
  %376 = vmatprep.subr.mxu0 0.0
  %377 = vmatpush1.msra.mxu0 0.0
  %378 = vmatprep.subr.mxu0 0.0
  %379 = vmatpush1.msra.mxu0 0.0
  %380 = vmatprep.subr.mxu0 0.0
  %381 = vmatpush1.msra.mxu0 0.0
  %382 = vmatprep.subr.mxu0 0.0
  %383 = vmatpush1.msra.mxu0 0.0
  %384 = vmatprep.subr.mxu0 0.0
  %385 = vmatpush1.msra.mxu0 0.0
  %386 = vmatprep.subr.mxu0 0.0
  %387 = vmatpush1.msra.mxu0 0.0
  %388 = vmatprep.subr.mxu0 0.0
  %389 = vmatpush1.msra.mxu0 0.0
  %390 = vmatprep.subr.mxu0 0.0
  %391 = vmatpush1.msra.mxu0 0.0
  %392 = vmatprep.subr.mxu0 0.0
  %393 = vmatpush1.msra.mxu0 0.0
  %394 = vmatprep.subr.mxu0 0.0
  %395 = vmatpush1.msra.mxu0 0.0
  %396 = vmatprep.subr.mxu0 0.0
  %397 = vmatpush1.msra.mxu0 0.0
  %398 = vmatprep.subr.mxu0 0.0
  %399 = vmatpush1.msra.mxu0 0.0
  %400 = vmatprep.mubr.f32.mxu0 0.0
  %401 = vmatmul.mubr.f32.gmra.mrb[0].mxu0 %v334
  %v402 = vpop.f32.mrb[0].mxu0
  %v403 = vadd.f32 0.0, %v402
  %v404 = vpop.f32.mrb[0].mxu0
  %405 = vdwg.mxu0
  %v406 = vadd.f32 %v333, %v403
  %v407 = vtanh.pop %v406
  %v408 = vxor.u32 %v406, 2147483648
  %v409 = vmul.f32 %v408, 1.442695
  %v410 = vpow.pop %v409
  %v411 = vadd.f32 %v410, 1.0
  %v412 = vrcp.pop %v411
  %v413 = vmul.f32 1.0, %v412
  %v414 = vmin.f32 %v406, 0.0
  %v415 = vand.u32 2147483647, %v406
  %v416 = vsub.f32 0.0, %v415
  %v417 = vmul.f32 %v416, 1.442695
  %v418 = vpow.pop %v417
  %v419 = vadd.f32 %v418, 1.0
  %v420 = vlog2.pop %v419
  %v421 = vmul.f32 %v420, 0.6931472
  %v422 = vsub.f32 %v414, %v421
  %v423 = vadd.f32 %v422, %v292
  %425 = vrot.lane.b32.xlu0 %v406, 32
  %v426 = vpop.permute.xlu0 %425
  %v428 = vmax.f32 %v423, %v426
  %430 = vrot.lane.b32.xlu0 %v428, 96
  %v431 = vpop.permute.xlu0 %430
  %v433 = vsub.f32 %v406, %v431
  %v434 = vmul.f32 %v433, 1.442695
  %v435 = vpow.pop %v434
  %v436 = vsub.f32 %v423, %v428
  %v437 = vmul.f32 %v436, 1.442695
  %v438 = vpow.pop %v437
  %v439 = vmul.f32 %v438, %v313
  %441 = vrot.lane.b32.xlu0 %v407, 64
  %v442 = vpop.permute.xlu0 %441
  %v444 = vmul.f32 %v435, %v442
  %446 = vrot.lane.b32.xlu0 %v444, 32
  %v447 = vpop.permute.xlu0 %446
  %v449 = vadd.f32 %v439, %v447
  %v450 = vmul.f32 %v438, %v318
  %452 = vrot.lane.b32.xlu0 %v435, 32
  %v453 = vpop.permute.xlu0 %452
  %v455 = vadd.f32 %v450, %v453
  %v456 = vrcp.pop %v455
  %v457 = vmul.f32 %v449, %v456
  %459 = vrot.lane.b32.xlu0 %v457, 64
  %v460 = vpop.permute.xlu0 %459
  %v462 = vmul.f32 %v413, %v460
  %464 = vrot.lane.b32.xlu0 %v462, 32
  %v465 = vpop.permute.xlu0 %464
  %s467 = scalar_lea.vmem [#allocation3], 2
  %468 = vst.msk [vmem:[%s467] sm:$0x3] %vm330, %v465
  %s469 = scalar_lea.vmem [#allocation2], 4
  %v470 = vld [vmem:[%s469] sm:$0x3]
  %v471 = vsel %vm52, %v465, 0
  %473 = vmatprep.subr.mxu0 0.0
  %474 = vmatpush1.msra.mxu0 %v192
  %475 = vmatprep.subr.mxu0 0.0
  %476 = vmatpush1.msra.mxu0 %v193
  %477 = vmatprep.subr.mxu0 0.0
  %478 = vmatpush1.msra.mxu0 %v194
  %479 = vmatprep.subr.mxu0 0.0
  %480 = vmatpush1.msra.mxu0 %v195
  %481 = vmatprep.subr.mxu0 0.0
  %482 = vmatpush1.msra.mxu0 0.0
  %483 = vmatprep.subr.mxu0 0.0
  %484 = vmatpush1.msra.mxu0 0.0
  %485 = vmatprep.subr.mxu0 0.0
  %486 = vmatpush1.msra.mxu0 0.0
  %487 = vmatprep.subr.mxu0 0.0
  %488 = vmatpush1.msra.mxu0 0.0
  %489 = vmatprep.subr.mxu0 0.0
  %490 = vmatpush1.msra.mxu0 0.0
  %491 = vmatprep.subr.mxu0 0.0
  %492 = vmatpush1.msra.mxu0 0.0
  %493 = vmatprep.subr.mxu0 0.0
  %494 = vmatpush1.msra.mxu0 0.0
  %495 = vmatprep.subr.mxu0 0.0
  %496 = vmatpush1.msra.mxu0 0.0
  %497 = vmatprep.subr.mxu0 0.0
  %498 = vmatpush1.msra.mxu0 0.0
  %499 = vmatprep.subr.mxu0 0.0
  %500 = vmatpush1.msra.mxu0 0.0
  %501 = vmatprep.subr.mxu0 0.0
  %502 = vmatpush1.msra.mxu0 0.0
  %503 = vmatprep.subr.mxu0 0.0
  %504 = vmatpush1.msra.mxu0 0.0
  %505 = vmatprep.subr.mxu0 0.0
  %506 = vmatpush1.msra.mxu0 0.0
  %507 = vmatprep.subr.mxu0 0.0
  %508 = vmatpush1.msra.mxu0 0.0
  %509 = vmatprep.subr.mxu0 0.0
  %510 = vmatpush1.msra.mxu0 0.0
  %511 = vmatprep.subr.mxu0 0.0
  %512 = vmatpush1.msra.mxu0 0.0
  %513 = vmatprep.subr.mxu0 0.0
  %514 = vmatpush1.msra.mxu0 0.0
  %515 = vmatprep.subr.mxu0 0.0
  %516 = vmatpush1.msra.mxu0 0.0
  %517 = vmatprep.subr.mxu0 0.0
  %518 = vmatpush1.msra.mxu0 0.0
  %519 = vmatprep.subr.mxu0 0.0
  %520 = vmatpush1.msra.mxu0 0.0
  %521 = vmatprep.subr.mxu0 0.0
  %522 = vmatpush1.msra.mxu0 0.0
  %523 = vmatprep.subr.mxu0 0.0
  %524 = vmatpush1.msra.mxu0 0.0
  %525 = vmatprep.subr.mxu0 0.0
  %526 = vmatpush1.msra.mxu0 0.0
  %527 = vmatprep.subr.mxu0 0.0
  %528 = vmatpush1.msra.mxu0 0.0
  %529 = vmatprep.subr.mxu0 0.0
  %530 = vmatpush1.msra.mxu0 0.0
  %531 = vmatprep.subr.mxu0 0.0
  %532 = vmatpush1.msra.mxu0 0.0
  %533 = vmatprep.subr.mxu0 0.0
  %534 = vmatpush1.msra.mxu0 0.0
  %535 = vmatprep.subr.mxu0 0.0
  %536 = vmatpush1.msra.mxu0 0.0
  %537 = vmatprep.mubr.f32.mxu0 0.0
  %538 = vmatmul.mubr.f32.gmra.mrb[0].mxu0 %v471
  %v539 = vpop.f32.mrb[0].mxu0
  %v540 = vadd.f32 0.0, %v539
  %v541 = vpop.f32.mrb[0].mxu0
  %542 = vdwg.mxu0
  %v543 = vadd.f32 %v470, %v540
  %v544 = vtanh.pop %v543
  %v545 = vxor.u32 %v543, 2147483648
  %v546 = vmul.f32 %v545, 1.442695
  %v547 = vpow.pop %v546
  %v548 = vadd.f32 %v547, 1.0
  %v549 = vrcp.pop %v548
  %v550 = vmul.f32 1.0, %v549
  %v551 = vmin.f32 %v543, 0.0
  %v552 = vand.u32 2147483647, %v543
  %v553 = vsub.f32 0.0, %v552
  %v554 = vmul.f32 %v553, 1.442695
  %v555 = vpow.pop %v554
  %v556 = vadd.f32 %v555, 1.0
  %v557 = vlog2.pop %v556
  %v558 = vmul.f32 %v557, 0.6931472
  %v559 = vsub.f32 %v551, %v558
  %v560 = vadd.f32 %v559, %v428
  %562 = vrot.lane.b32.xlu0 %v543, 32
  %v563 = vpop.permute.xlu0 %562
  %v565 = vmax.f32 %v560, %v563
  %567 = vrot.lane.b32.xlu0 %v565, 96
  %v568 = vpop.permute.xlu0 %567
  %v570 = vsub.f32 %v543, %v568
  %v571 = vmul.f32 %v570, 1.442695
  %v572 = vpow.pop %v571
  %v573 = vsub.f32 %v560, %v565
  %v574 = vmul.f32 %v573, 1.442695
  %v575 = vpow.pop %v574
  %v576 = vmul.f32 %v575, %v449
  %578 = vrot.lane.b32.xlu0 %v544, 64
  %v579 = vpop.permute.xlu0 %578
  %v581 = vmul.f32 %v572, %v579
  %583 = vrot.lane.b32.xlu0 %v581, 32
  %v584 = vpop.permute.xlu0 %583
  %v586 = vadd.f32 %v576, %v584
  %v587 = vmul.f32 %v575, %v455
  %589 = vrot.lane.b32.xlu0 %v572, 32
  %v590 = vpop.permute.xlu0 %589
  %v592 = vadd.f32 %v587, %v590
  %v593 = vrcp.pop %v592
  %v594 = vmul.f32 %v586, %v593
  %596 = vrot.lane.b32.xlu0 %v594, 64
  %v597 = vpop.permute.xlu0 %596
  %v599 = vmul.f32 %v550, %v597
  %601 = vrot.lane.b32.xlu0 %v599, 32
  %v602 = vpop.permute.xlu0 %601
  %s604 = scalar_lea.vmem [#allocation3], 4
  %605 = vst.msk [vmem:[%s604] sm:$0x3] %vm330, %v602
  %s606 = scalar_lea.vmem [#allocation2], 6
  %v607 = vld [vmem:[%s606] sm:$0x3]
  %v608 = vsel %vm52, %v602, 0
  %610 = vmatprep.subr.mxu0 0.0
  %611 = vmatpush1.msra.mxu0 %v192
  %612 = vmatprep.subr.mxu0 0.0
  %613 = vmatpush1.msra.mxu0 %v193
  %614 = vmatprep.subr.mxu0 0.0
  %615 = vmatpush1.msra.mxu0 %v194
  %616 = vmatprep.subr.mxu0 0.0
  %617 = vmatpush1.msra.mxu0 %v195
  %618 = vmatprep.subr.mxu0 0.0
  %619 = vmatpush1.msra.mxu0 0.0
  %620 = vmatprep.subr.mxu0 0.0
  %621 = vmatpush1.msra.mxu0 0.0
  %622 = vmatprep.subr.mxu0 0.0
  %623 = vmatpush1.msra.mxu0 0.0
  %624 = vmatprep.subr.mxu0 0.0
  %625 = vmatpush1.msra.mxu0 0.0
  %626 = vmatprep.subr.mxu0 0.0
  %627 = vmatpush1.msra.mxu0 0.0
  %628 = vmatprep.subr.mxu0 0.0
  %629 = vmatpush1.msra.mxu0 0.0
  %630 = vmatprep.subr.mxu0 0.0
  %631 = vmatpush1.msra.mxu0 0.0
  %632 = vmatprep.subr.mxu0 0.0
  %633 = vmatpush1.msra.mxu0 0.0
  %634 = vmatprep.subr.mxu0 0.0
  %635 = vmatpush1.msra.mxu0 0.0
  %636 = vmatprep.subr.mxu0 0.0
  %637 = vmatpush1.msra.mxu0 0.0
  %638 = vmatprep.subr.mxu0 0.0
  %639 = vmatpush1.msra.mxu0 0.0
  %640 = vmatprep.subr.mxu0 0.0
  %641 = vmatpush1.msra.mxu0 0.0
  %642 = vmatprep.subr.mxu0 0.0
  %643 = vmatpush1.msra.mxu0 0.0
  %644 = vmatprep.subr.mxu0 0.0
  %645 = vmatpush1.msra.mxu0 0.0
  %646 = vmatprep.subr.mxu0 0.0
  %647 = vmatpush1.msra.mxu0 0.0
  %648 = vmatprep.subr.mxu0 0.0
  %649 = vmatpush1.msra.mxu0 0.0
  %650 = vmatprep.subr.mxu0 0.0
  %651 = vmatpush1.msra.mxu0 0.0
  %652 = vmatprep.subr.mxu0 0.0
  %653 = vmatpush1.msra.mxu0 0.0
  %654 = vmatprep.subr.mxu0 0.0
  %655 = vmatpush1.msra.mxu0 0.0
  %656 = vmatprep.subr.mxu0 0.0
  %657 = vmatpush1.msra.mxu0 0.0
  %658 = vmatprep.subr.mxu0 0.0
  %659 = vmatpush1.msra.mxu0 0.0
  %660 = vmatprep.subr.mxu0 0.0
  %661 = vmatpush1.msra.mxu0 0.0
  %662 = vmatprep.subr.mxu0 0.0
  %663 = vmatpush1.msra.mxu0 0.0
  %664 = vmatprep.subr.mxu0 0.0
  %665 = vmatpush1.msra.mxu0 0.0
  %666 = vmatprep.subr.mxu0 0.0
  %667 = vmatpush1.msra.mxu0 0.0
  %668 = vmatprep.subr.mxu0 0.0
  %669 = vmatpush1.msra.mxu0 0.0
  %670 = vmatprep.subr.mxu0 0.0
  %671 = vmatpush1.msra.mxu0 0.0
  %672 = vmatprep.subr.mxu0 0.0
  %673 = vmatpush1.msra.mxu0 0.0
  %674 = vmatprep.mubr.f32.mxu0 0.0
  %675 = vmatmul.mubr.f32.gmra.mrb[0].mxu0 %v608
  %v676 = vpop.f32.mrb[0].mxu0
  %v677 = vadd.f32 0.0, %v676
  %v678 = vpop.f32.mrb[0].mxu0
  %679 = vdwg.mxu0
  %v680 = vadd.f32 %v607, %v677
  %v681 = vtanh.pop %v680
  %v682 = vxor.u32 %v680, 2147483648
  %v683 = vmul.f32 %v682, 1.442695
  %v684 = vpow.pop %v683
  %v685 = vadd.f32 %v684, 1.0
  %v686 = vrcp.pop %v685
  %v687 = vmul.f32 1.0, %v686
  %v688 = vmin.f32 %v680, 0.0
  %v689 = vand.u32 2147483647, %v680
  %v690 = vsub.f32 0.0, %v689
  %v691 = vmul.f32 %v690, 1.442695
  %v692 = vpow.pop %v691
  %v693 = vadd.f32 %v692, 1.0
  %v694 = vlog2.pop %v693
  %v695 = vmul.f32 %v694, 0.6931472
  %v696 = vsub.f32 %v688, %v695
  %v697 = vadd.f32 %v696, %v565
  %699 = vrot.lane.b32.xlu0 %v680, 32
  %v700 = vpop.permute.xlu0 %699
  %v702 = vmax.f32 %v697, %v700
  %704 = vrot.lane.b32.xlu0 %v702, 96
  %v705 = vpop.permute.xlu0 %704
  %v707 = vsub.f32 %v680, %v705
  %v708 = vmul.f32 %v707, 1.442695
  %v709 = vpow.pop %v708
  %v710 = vsub.f32 %v697, %v702
  %v711 = vmul.f32 %v710, 1.442695
  %v712 = vpow.pop %v711
  %v713 = vmul.f32 %v712, %v586
  %715 = vrot.lane.b32.xlu0 %v681, 64
  %v716 = vpop.permute.xlu0 %715
  %v718 = vmul.f32 %v709, %v716
  %720 = vrot.lane.b32.xlu0 %v718, 32
  %v721 = vpop.permute.xlu0 %720
  %v723 = vadd.f32 %v713, %v721
  %v724 = vmul.f32 %v712, %v592
  %726 = vrot.lane.b32.xlu0 %v709, 32
  %v727 = vpop.permute.xlu0 %726
  %v729 = vadd.f32 %v724, %v727
  %v730 = vrcp.pop %v729
  %v731 = vmul.f32 %v723, %v730
  %733 = vrot.lane.b32.xlu0 %v731, 64
  %v734 = vpop.permute.xlu0 %733
  %v736 = vmul.f32 %v687, %v734
  %738 = vrot.lane.b32.xlu0 %v736, 32
  %v739 = vpop.permute.xlu0 %738
  %s741 = scalar_lea.vmem [#allocation3], 6
  %742 = vst.msk [vmem:[%s741] sm:$0x3] %vm330, %v739
  %s743 = scalar_lea.vmem [#allocation2], 8
  %v744 = vld [vmem:[%s743] sm:$0x3]
  %v745 = vsel %vm52, %v739, 0
  %747 = vmatprep.subr.mxu0 0.0
  %748 = vmatpush1.msra.mxu0 %v192
  %749 = vmatprep.subr.mxu0 0.0
  %750 = vmatpush1.msra.mxu0 %v193
  %751 = vmatprep.subr.mxu0 0.0
  %752 = vmatpush1.msra.mxu0 %v194
  %753 = vmatprep.subr.mxu0 0.0
  %754 = vmatpush1.msra.mxu0 %v195
  %755 = vmatprep.subr.mxu0 0.0
  %756 = vmatpush1.msra.mxu0 0.0
  %757 = vmatprep.subr.mxu0 0.0
  %758 = vmatpush1.msra.mxu0 0.0
  %759 = vmatprep.subr.mxu0 0.0
  %760 = vmatpush1.msra.mxu0 0.0
  %761 = vmatprep.subr.mxu0 0.0
  %762 = vmatpush1.msra.mxu0 0.0
  %763 = vmatprep.subr.mxu0 0.0
  %764 = vmatpush1.msra.mxu0 0.0
  %765 = vmatprep.subr.mxu0 0.0
  %766 = vmatpush1.msra.mxu0 0.0
  %767 = vmatprep.subr.mxu0 0.0
  %768 = vmatpush1.msra.mxu0 0.0
  %769 = vmatprep.subr.mxu0 0.0
  %770 = vmatpush1.msra.mxu0 0.0
  %771 = vmatprep.subr.mxu0 0.0
  %772 = vmatpush1.msra.mxu0 0.0
  %773 = vmatprep.subr.mxu0 0.0
  %774 = vmatpush1.msra.mxu0 0.0
  %775 = vmatprep.subr.mxu0 0.0
  %776 = vmatpush1.msra.mxu0 0.0
  %777 = vmatprep.subr.mxu0 0.0
  %778 = vmatpush1.msra.mxu0 0.0
  %779 = vmatprep.subr.mxu0 0.0
  %780 = vmatpush1.msra.mxu0 0.0
  %781 = vmatprep.subr.mxu0 0.0
  %782 = vmatpush1.msra.mxu0 0.0
  %783 = vmatprep.subr.mxu0 0.0
  %784 = vmatpush1.msra.mxu0 0.0
  %785 = vmatprep.subr.mxu0 0.0
  %786 = vmatpush1.msra.mxu0 0.0
  %787 = vmatprep.subr.mxu0 0.0
  %788 = vmatpush1.msra.mxu0 0.0
  %789 = vmatprep.subr.mxu0 0.0
  %790 = vmatpush1.msra.mxu0 0.0
  %791 = vmatprep.subr.mxu0 0.0
  %792 = vmatpush1.msra.mxu0 0.0
  %793 = vmatprep.subr.mxu0 0.0
  %794 = vmatpush1.msra.mxu0 0.0
  %795 = vmatprep.subr.mxu0 0.0
  %796 = vmatpush1.msra.mxu0 0.0
  %797 = vmatprep.subr.mxu0 0.0
  %798 = vmatpush1.msra.mxu0 0.0
  %799 = vmatprep.subr.mxu0 0.0
  %800 = vmatpush1.msra.mxu0 0.0
  %801 = vmatprep.subr.mxu0 0.0
  %802 = vmatpush1.msra.mxu0 0.0
  %803 = vmatprep.subr.mxu0 0.0
  %804 = vmatpush1.msra.mxu0 0.0
  %805 = vmatprep.subr.mxu0 0.0
  %806 = vmatpush1.msra.mxu0 0.0
  %807 = vmatprep.subr.mxu0 0.0
  %808 = vmatpush1.msra.mxu0 0.0
  %809 = vmatprep.subr.mxu0 0.0
  %810 = vmatpush1.msra.mxu0 0.0
  %811 = vmatprep.mubr.f32.mxu0 0.0
  %812 = vmatmul.mubr.f32.gmra.mrb[0].mxu0 %v745
  %v813 = vpop.f32.mrb[0].mxu0
  %v814 = vadd.f32 0.0, %v813
  %v815 = vpop.f32.mrb[0].mxu0
  %816 = vdwg.mxu0
  %v817 = vadd.f32 %v744, %v814
  %v818 = vtanh.pop %v817
  %v819 = vxor.u32 %v817, 2147483648
  %v820 = vmul.f32 %v819, 1.442695
  %v821 = vpow.pop %v820
  %v822 = vadd.f32 %v821, 1.0
  %v823 = vrcp.pop %v822
  %v824 = vmul.f32 1.0, %v823
  %v825 = vmin.f32 %v817, 0.0
  %v826 = vand.u32 2147483647, %v817
  %v827 = vsub.f32 0.0, %v826
  %v828 = vmul.f32 %v827, 1.442695
  %v829 = vpow.pop %v828
  %v830 = vadd.f32 %v829, 1.0
  %v831 = vlog2.pop %v830
  %v832 = vmul.f32 %v831, 0.6931472
  %v833 = vsub.f32 %v825, %v832
  %v834 = vadd.f32 %v833, %v702
  %836 = vrot.lane.b32.xlu0 %v817, 32
  %v837 = vpop.permute.xlu0 %836
  %v839 = vmax.f32 %v834, %v837
  %841 = vrot.lane.b32.xlu0 %v839, 96
  %v842 = vpop.permute.xlu0 %841
  %v844 = vsub.f32 %v817, %v842
  %v845 = vmul.f32 %v844, 1.442695
  %v846 = vpow.pop %v845
  %v847 = vsub.f32 %v834, %v839
  %v848 = vmul.f32 %v847, 1.442695
  %v849 = vpow.pop %v848
  %v850 = vmul.f32 %v849, %v723
  %852 = vrot.lane.b32.xlu0 %v818, 64
  %v853 = vpop.permute.xlu0 %852
  %v855 = vmul.f32 %v846, %v853
  %857 = vrot.lane.b32.xlu0 %v855, 32
  %v858 = vpop.permute.xlu0 %857
  %v860 = vadd.f32 %v850, %v858
  %v861 = vmul.f32 %v849, %v729
  %863 = vrot.lane.b32.xlu0 %v846, 32
  %v864 = vpop.permute.xlu0 %863
  %v866 = vadd.f32 %v861, %v864
  %v867 = vrcp.pop %v866
  %v868 = vmul.f32 %v860, %v867
  %870 = vrot.lane.b32.xlu0 %v868, 64
  %v871 = vpop.permute.xlu0 %870
  %v873 = vmul.f32 %v824, %v871
  %875 = vrot.lane.b32.xlu0 %v873, 32
  %v876 = vpop.permute.xlu0 %875
  %s878 = scalar_lea.vmem [#allocation3], 8
  %879 = vst.msk [vmem:[%s878] sm:$0x3] %vm330, %v876
  %s880 = scalar_lea.vmem [#allocation2], 10
  %v881 = vld [vmem:[%s880] sm:$0x3]
  %v882 = vsel %vm52, %v876, 0
  %884 = vmatprep.subr.mxu0 0.0
  %885 = vmatpush1.msra.mxu0 %v192
  %886 = vmatprep.subr.mxu0 0.0
  %887 = vmatpush1.msra.mxu0 %v193
  %888 = vmatprep.subr.mxu0 0.0
  %889 = vmatpush1.msra.mxu0 %v194
  %890 = vmatprep.subr.mxu0 0.0
  %891 = vmatpush1.msra.mxu0 %v195
  %892 = vmatprep.subr.mxu0 0.0
  %893 = vmatpush1.msra.mxu0 0.0
  %894 = vmatprep.subr.mxu0 0.0
  %895 = vmatpush1.msra.mxu0 0.0
  %896 = vmatprep.subr.mxu0 0.0
  %897 = vmatpush1.msra.mxu0 0.0
  %898 = vmatprep.subr.mxu0 0.0
  %899 = vmatpush1.msra.mxu0 0.0
  %900 = vmatprep.subr.mxu0 0.0
  %901 = vmatpush1.msra.mxu0 0.0
  %902 = vmatprep.subr.mxu0 0.0
  %903 = vmatpush1.msra.mxu0 0.0
  %904 = vmatprep.subr.mxu0 0.0
  %905 = vmatpush1.msra.mxu0 0.0
  %906 = vmatprep.subr.mxu0 0.0
  %907 = vmatpush1.msra.mxu0 0.0
  %908 = vmatprep.subr.mxu0 0.0
  %909 = vmatpush1.msra.mxu0 0.0
  %910 = vmatprep.subr.mxu0 0.0
  %911 = vmatpush1.msra.mxu0 0.0
  %912 = vmatprep.subr.mxu0 0.0
  %913 = vmatpush1.msra.mxu0 0.0
  %914 = vmatprep.subr.mxu0 0.0
  %915 = vmatpush1.msra.mxu0 0.0
  %916 = vmatprep.subr.mxu0 0.0
  %917 = vmatpush1.msra.mxu0 0.0
  %918 = vmatprep.subr.mxu0 0.0
  %919 = vmatpush1.msra.mxu0 0.0
  %920 = vmatprep.subr.mxu0 0.0
  %921 = vmatpush1.msra.mxu0 0.0
  %922 = vmatprep.subr.mxu0 0.0
  %923 = vmatpush1.msra.mxu0 0.0
  %924 = vmatprep.subr.mxu0 0.0
  %925 = vmatpush1.msra.mxu0 0.0
  %926 = vmatprep.subr.mxu0 0.0
  %927 = vmatpush1.msra.mxu0 0.0
  %928 = vmatprep.subr.mxu0 0.0
  %929 = vmatpush1.msra.mxu0 0.0
  %930 = vmatprep.subr.mxu0 0.0
  %931 = vmatpush1.msra.mxu0 0.0
  %932 = vmatprep.subr.mxu0 0.0
  %933 = vmatpush1.msra.mxu0 0.0
  %934 = vmatprep.subr.mxu0 0.0
  %935 = vmatpush1.msra.mxu0 0.0
  %936 = vmatprep.subr.mxu0 0.0
  %937 = vmatpush1.msra.mxu0 0.0
  %938 = vmatprep.subr.mxu0 0.0
  %939 = vmatpush1.msra.mxu0 0.0
  %940 = vmatprep.subr.mxu0 0.0
  %941 = vmatpush1.msra.mxu0 0.0
  %942 = vmatprep.subr.mxu0 0.0
  %943 = vmatpush1.msra.mxu0 0.0
  %944 = vmatprep.subr.mxu0 0.0
  %945 = vmatpush1.msra.mxu0 0.0
  %946 = vmatprep.subr.mxu0 0.0
  %947 = vmatpush1.msra.mxu0 0.0
  %948 = vmatprep.mubr.f32.mxu0 0.0
  %949 = vmatmul.mubr.f32.gmra.mrb[0].mxu0 %v882
  %v950 = vpop.f32.mrb[0].mxu0
  %v951 = vadd.f32 0.0, %v950
  %v952 = vpop.f32.mrb[0].mxu0
  %953 = vdwg.mxu0
  %v954 = vadd.f32 %v881, %v951
  %v955 = vtanh.pop %v954
  %v956 = vxor.u32 %v954, 2147483648
  %v957 = vmul.f32 %v956, 1.442695
  %v958 = vpow.pop %v957
  %v959 = vadd.f32 %v958, 1.0
  %v960 = vrcp.pop %v959
  %v961 = vmul.f32 1.0, %v960
  %v962 = vmin.f32 %v954, 0.0
  %v963 = vand.u32 2147483647, %v954
  %v964 = vsub.f32 0.0, %v963
  %v965 = vmul.f32 %v964, 1.442695
  %v966 = vpow.pop %v965
  %v967 = vadd.f32 %v966, 1.0
  %v968 = vlog2.pop %v967
  %v969 = vmul.f32 %v968, 0.6931472
  %v970 = vsub.f32 %v962, %v969
  %v971 = vadd.f32 %v970, %v839
  %973 = vrot.lane.b32.xlu0 %v954, 32
  %v974 = vpop.permute.xlu0 %973
  %v976 = vmax.f32 %v971, %v974
  %978 = vrot.lane.b32.xlu0 %v976, 96
  %v979 = vpop.permute.xlu0 %978
  %v981 = vsub.f32 %v954, %v979
  %v982 = vmul.f32 %v981, 1.442695
  %v983 = vpow.pop %v982
  %v984 = vsub.f32 %v971, %v976
  %v985 = vmul.f32 %v984, 1.442695
  %v986 = vpow.pop %v985
  %v987 = vmul.f32 %v986, %v860
  %989 = vrot.lane.b32.xlu0 %v955, 64
  %v990 = vpop.permute.xlu0 %989
  %v992 = vmul.f32 %v983, %v990
  %994 = vrot.lane.b32.xlu0 %v992, 32
  %v995 = vpop.permute.xlu0 %994
  %v997 = vadd.f32 %v987, %v995
  %v998 = vmul.f32 %v986, %v866
  %1000 = vrot.lane.b32.xlu0 %v983, 32
  %v1001 = vpop.permute.xlu0 %1000
  %v1003 = vadd.f32 %v998, %v1001
  %v1004 = vrcp.pop %v1003
  %v1005 = vmul.f32 %v997, %v1004
  %1007 = vrot.lane.b32.xlu0 %v1005, 64
  %v1008 = vpop.permute.xlu0 %1007
  %v1010 = vmul.f32 %v961, %v1008
  %1012 = vrot.lane.b32.xlu0 %v1010, 32
  %v1013 = vpop.permute.xlu0 %1012
  %s1015 = scalar_lea.vmem [#allocation3], 10
  %1016 = vst.msk [vmem:[%s1015] sm:$0x3] %vm330, %v1013
  %s1017 = scalar_lea.vmem [#allocation2], 12
  %v1018 = vld [vmem:[%s1017] sm:$0x3]
  %v1019 = vsel %vm52, %v1013, 0
  %1021 = vmatprep.subr.mxu0 0.0
  %1022 = vmatpush1.msra.mxu0 %v192
  %1023 = vmatprep.subr.mxu0 0.0
  %1024 = vmatpush1.msra.mxu0 %v193
  %1025 = vmatprep.subr.mxu0 0.0
  %1026 = vmatpush1.msra.mxu0 %v194
  %1027 = vmatprep.subr.mxu0 0.0
  %1028 = vmatpush1.msra.mxu0 %v195
  %1029 = vmatprep.subr.mxu0 0.0
  %1030 = vmatpush1.msra.mxu0 0.0
  %1031 = vmatprep.subr.mxu0 0.0
  %1032 = vmatpush1.msra.mxu0 0.0
  %1033 = vmatprep.subr.mxu0 0.0
  %1034 = vmatpush1.msra.mxu0 0.0
  %1035 = vmatprep.subr.mxu0 0.0
  %1036 = vmatpush1.msra.mxu0 0.0
  %1037 = vmatprep.subr.mxu0 0.0
  %1038 = vmatpush1.msra.mxu0 0.0
  %1039 = vmatprep.subr.mxu0 0.0
  %1040 = vmatpush1.msra.mxu0 0.0
  %1041 = vmatprep.subr.mxu0 0.0
  %1042 = vmatpush1.msra.mxu0 0.0
  %1043 = vmatprep.subr.mxu0 0.0
  %1044 = vmatpush1.msra.mxu0 0.0
  %1045 = vmatprep.subr.mxu0 0.0
  %1046 = vmatpush1.msra.mxu0 0.0
  %1047 = vmatprep.subr.mxu0 0.0
  %1048 = vmatpush1.msra.mxu0 0.0
  %1049 = vmatprep.subr.mxu0 0.0
  %1050 = vmatpush1.msra.mxu0 0.0
  %1051 = vmatprep.subr.mxu0 0.0
  %1052 = vmatpush1.msra.mxu0 0.0
  %1053 = vmatprep.subr.mxu0 0.0
  %1054 = vmatpush1.msra.mxu0 0.0
  %1055 = vmatprep.subr.mxu0 0.0
  %1056 = vmatpush1.msra.mxu0 0.0
  %1057 = vmatprep.subr.mxu0 0.0
  %1058 = vmatpush1.msra.mxu0 0.0
  %1059 = vmatprep.subr.mxu0 0.0
  %1060 = vmatpush1.msra.mxu0 0.0
  %1061 = vmatprep.subr.mxu0 0.0
  %1062 = vmatpush1.msra.mxu0 0.0
  %1063 = vmatprep.subr.mxu0 0.0
  %1064 = vmatpush1.msra.mxu0 0.0
  %1065 = vmatprep.subr.mxu0 0.0
  %1066 = vmatpush1.msra.mxu0 0.0
  %1067 = vmatprep.subr.mxu0 0.0
  %1068 = vmatpush1.msra.mxu0 0.0
  %1069 = vmatprep.subr.mxu0 0.0
  %1070 = vmatpush1.msra.mxu0 0.0
  %1071 = vmatprep.subr.mxu0 0.0
  %1072 = vmatpush1.msra.mxu0 0.0
  %1073 = vmatprep.subr.mxu0 0.0
  %1074 = vmatpush1.msra.mxu0 0.0
  %1075 = vmatprep.subr.mxu0 0.0
  %1076 = vmatpush1.msra.mxu0 0.0
  %1077 = vmatprep.subr.mxu0 0.0
  %1078 = vmatpush1.msra.mxu0 0.0
  %1079 = vmatprep.subr.mxu0 0.0
  %1080 = vmatpush1.msra.mxu0 0.0
  %1081 = vmatprep.subr.mxu0 0.0
  %1082 = vmatpush1.msra.mxu0 0.0
  %1083 = vmatprep.subr.mxu0 0.0
  %1084 = vmatpush1.msra.mxu0 0.0
  %1085 = vmatprep.mubr.f32.mxu0 0.0
  %1086 = vmatmul.mubr.f32.gmra.mrb[0].mxu0 %v1019
  %v1087 = vpop.f32.mrb[0].mxu0
  %v1088 = vadd.f32 0.0, %v1087
  %v1089 = vpop.f32.mrb[0].mxu0
  %1090 = vdwg.mxu0
  %v1091 = vadd.f32 %v1018, %v1088
  %v1092 = vtanh.pop %v1091
  %v1093 = vxor.u32 %v1091, 2147483648
  %v1094 = vmul.f32 %v1093, 1.442695
  %v1095 = vpow.pop %v1094
  %v1096 = vadd.f32 %v1095, 1.0
  %v1097 = vrcp.pop %v1096
  %v1098 = vmul.f32 1.0, %v1097
  %v1099 = vmin.f32 %v1091, 0.0
  %v1100 = vand.u32 2147483647, %v1091
  %v1101 = vsub.f32 0.0, %v1100
  %v1102 = vmul.f32 %v1101, 1.442695
  %v1103 = vpow.pop %v1102
  %v1104 = vadd.f32 %v1103, 1.0
  %v1105 = vlog2.pop %v1104
  %v1106 = vmul.f32 %v1105, 0.6931472
  %v1107 = vsub.f32 %v1099, %v1106
  %v1108 = vadd.f32 %v1107, %v976
  %1110 = vrot.lane.b32.xlu0 %v1091, 32
  %v1111 = vpop.permute.xlu0 %1110
  %v1113 = vmax.f32 %v1108, %v1111
  %1115 = vrot.lane.b32.xlu0 %v1113, 96
  %v1116 = vpop.permute.xlu0 %1115
  %v1118 = vsub.f32 %v1091, %v1116
  %v1119 = vmul.f32 %v1118, 1.442695
  %v1120 = vpow.pop %v1119
  %v1121 = vsub.f32 %v1108, %v1113
  %v1122 = vmul.f32 %v1121, 1.442695
  %v1123 = vpow.pop %v1122
  %v1124 = vmul.f32 %v1123, %v997
  %1126 = vrot.lane.b32.xlu0 %v1092, 64
  %v1127 = vpop.permute.xlu0 %1126
  %v1129 = vmul.f32 %v1120, %v1127
  %1131 = vrot.lane.b32.xlu0 %v1129, 32
  %v1132 = vpop.permute.xlu0 %1131
  %v1134 = vadd.f32 %v1124, %v1132
  %v1135 = vmul.f32 %v1123, %v1003
  %1137 = vrot.lane.b32.xlu0 %v1120, 32
  %v1138 = vpop.permute.xlu0 %1137
  %v1140 = vadd.f32 %v1135, %v1138
  %v1141 = vrcp.pop %v1140
  %v1142 = vmul.f32 %v1134, %v1141
  %1144 = vrot.lane.b32.xlu0 %v1142, 64
  %v1145 = vpop.permute.xlu0 %1144
  %v1147 = vmul.f32 %v1098, %v1145
  %1149 = vrot.lane.b32.xlu0 %v1147, 32
  %v1150 = vpop.permute.xlu0 %1149
  %s1152 = scalar_lea.vmem [#allocation3], 12
  %1153 = vst.msk [vmem:[%s1152] sm:$0x3] %vm330, %v1150
  %s1154 = scalar_lea.vmem [#allocation2], 14
  %v1155 = vld [vmem:[%s1154] sm:$0x3]
  %v1156 = vsel %vm52, %v1150, 0
  %1158 = vmatprep.subr.mxu0 0.0
  %1159 = vmatpush1.msra.mxu0 %v192
  %1160 = vmatprep.subr.mxu0 0.0
  %1161 = vmatpush1.msra.mxu0 %v193
  %1162 = vmatprep.subr.mxu0 0.0
  %1163 = vmatpush1.msra.mxu0 %v194
  %1164 = vmatprep.subr.mxu0 0.0
  %1165 = vmatpush1.msra.mxu0 %v195
  %1166 = vmatprep.subr.mxu0 0.0
  %1167 = vmatpush1.msra.mxu0 0.0
  %1168 = vmatprep.subr.mxu0 0.0
  %1169 = vmatpush1.msra.mxu0 0.0
  %1170 = vmatprep.subr.mxu0 0.0
  %1171 = vmatpush1.msra.mxu0 0.0
  %1172 = vmatprep.subr.mxu0 0.0
  %1173 = vmatpush1.msra.mxu0 0.0
  %1174 = vmatprep.subr.mxu0 0.0
  %1175 = vmatpush1.msra.mxu0 0.0
  %1176 = vmatprep.subr.mxu0 0.0
  %1177 = vmatpush1.msra.mxu0 0.0
  %1178 = vmatprep.subr.mxu0 0.0
  %1179 = vmatpush1.msra.mxu0 0.0
  %1180 = vmatprep.subr.mxu0 0.0
  %1181 = vmatpush1.msra.mxu0 0.0
  %1182 = vmatprep.subr.mxu0 0.0
  %1183 = vmatpush1.msra.mxu0 0.0
  %1184 = vmatprep.subr.mxu0 0.0
  %1185 = vmatpush1.msra.mxu0 0.0
  %1186 = vmatprep.subr.mxu0 0.0
  %1187 = vmatpush1.msra.mxu0 0.0
  %1188 = vmatprep.subr.mxu0 0.0
  %1189 = vmatpush1.msra.mxu0 0.0
  %1190 = vmatprep.subr.mxu0 0.0
  %1191 = vmatpush1.msra.mxu0 0.0
  %1192 = vmatprep.subr.mxu0 0.0
  %1193 = vmatpush1.msra.mxu0 0.0
  %1194 = vmatprep.subr.mxu0 0.0
  %1195 = vmatpush1.msra.mxu0 0.0
  %1196 = vmatprep.subr.mxu0 0.0
  %1197 = vmatpush1.msra.mxu0 0.0
  %1198 = vmatprep.subr.mxu0 0.0
  %1199 = vmatpush1.msra.mxu0 0.0
  %1200 = vmatprep.subr.mxu0 0.0
  %1201 = vmatpush1.msra.mxu0 0.0
  %1202 = vmatprep.subr.mxu0 0.0
  %1203 = vmatpush1.msra.mxu0 0.0
  %1204 = vmatprep.subr.mxu0 0.0
  %1205 = vmatpush1.msra.mxu0 0.0
  %1206 = vmatprep.subr.mxu0 0.0
  %1207 = vmatpush1.msra.mxu0 0.0
  %1208 = vmatprep.subr.mxu0 0.0
  %1209 = vmatpush1.msra.mxu0 0.0
  %1210 = vmatprep.subr.mxu0 0.0
  %1211 = vmatpush1.msra.mxu0 0.0
  %1212 = vmatprep.subr.mxu0 0.0
  %1213 = vmatpush1.msra.mxu0 0.0
  %1214 = vmatprep.subr.mxu0 0.0
  %1215 = vmatpush1.msra.mxu0 0.0
  %1216 = vmatprep.subr.mxu0 0.0
  %1217 = vmatpush1.msra.mxu0 0.0
  %1218 = vmatprep.subr.mxu0 0.0
  %1219 = vmatpush1.msra.mxu0 0.0
  %1220 = vmatprep.subr.mxu0 0.0
  %1221 = vmatpush1.msra.mxu0 0.0
  %1222 = vmatprep.mubr.f32.mxu0 0.0
  %1223 = vmatmul.mubr.f32.gmra.mrb[0].mxu0 %v1156
  %v1224 = vpop.f32.mrb[0].mxu0
  %v1225 = vadd.f32 0.0, %v1224
  %v1226 = vpop.f32.mrb[0].mxu0
  %1227 = vdwg.mxu0
  %v1228 = vadd.f32 %v1155, %v1225
  %v1229 = vtanh.pop %v1228
  %v1230 = vxor.u32 %v1228, 2147483648
  %v1231 = vmul.f32 %v1230, 1.442695
  %v1232 = vpow.pop %v1231
  %v1233 = vadd.f32 %v1232, 1.0
  %v1234 = vrcp.pop %v1233
  %v1235 = vmul.f32 1.0, %v1234
  %v1236 = vmin.f32 %v1228, 0.0
  %v1237 = vand.u32 2147483647, %v1228
  %v1238 = vsub.f32 0.0, %v1237
  %v1239 = vmul.f32 %v1238, 1.442695
  %v1240 = vpow.pop %v1239
  %v1241 = vadd.f32 %v1240, 1.0
  %v1242 = vlog2.pop %v1241
  %v1243 = vmul.f32 %v1242, 0.6931472
  %v1244 = vsub.f32 %v1236, %v1243
  %v1245 = vadd.f32 %v1244, %v1113
  %1247 = vrot.lane.b32.xlu0 %v1228, 32
  %v1248 = vpop.permute.xlu0 %1247
  %v1250 = vmax.f32 %v1245, %v1248
  %1252 = vrot.lane.b32.xlu0 %v1250, 96
  %v1253 = vpop.permute.xlu0 %1252
  %v1255 = vsub.f32 %v1228, %v1253
  %v1256 = vmul.f32 %v1255, 1.442695
  %v1257 = vpow.pop %v1256
  %v1258 = vsub.f32 %v1245, %v1250
  %v1259 = vmul.f32 %v1258, 1.442695
  %v1260 = vpow.pop %v1259
  %v1261 = vmul.f32 %v1260, %v1134
  %1263 = vrot.lane.b32.xlu0 %v1229, 64
  %v1264 = vpop.permute.xlu0 %1263
  %v1266 = vmul.f32 %v1257, %v1264
  %1268 = vrot.lane.b32.xlu0 %v1266, 32
  %v1269 = vpop.permute.xlu0 %1268
  %v1271 = vadd.f32 %v1261, %v1269
  %v1272 = vmul.f32 %v1260, %v1140
  %1274 = vrot.lane.b32.xlu0 %v1257, 32
  %v1275 = vpop.permute.xlu0 %1274
  %v1277 = vadd.f32 %v1272, %v1275
  %v1278 = vrcp.pop %v1277
  %v1279 = vmul.f32 %v1271, %v1278
  %1281 = vrot.lane.b32.xlu0 %v1279, 64
  %v1282 = vpop.permute.xlu0 %1281
  %v1284 = vmul.f32 %v1235, %v1282
  %1286 = vrot.lane.b32.xlu0 %v1284, 32
  %v1287 = vpop.permute.xlu0 %1286
  %s1289 = scalar_lea.vmem [#allocation3], 14
  %1290 = vst.msk [vmem:[%s1289] sm:$0x3] %vm330, %v1287
  %v1291 = vld [vmem:[#allocation3] sm:$0xff]
  %v1292 = vld [vmem:[#allocation3 + $0x8] sm:$0xff]
  %v1293 = vld [vmem:[%s6] sm:$0xff]
  %v1294 = vld [vmem:[%s6 + $0x8] sm:$0xff]
  %v1295 = vld [vmem:[%s6 + $0x10] sm:$0xff]
  %v1296 = vld [vmem:[%s6 + $0x18] sm:$0xff]
  %v1298 = vsel %vm52, %v1291, 0
  %v1301 = vsel %vm52, %v1292, 0
  %1303 = vmatprep.subr.mxu0 0.0
  %1304 = vmatpush1.msra.mxu0 %v1293
  %1305 = vmatprep.subr.mxu0 0.0
  %1306 = vmatpush1.msra.mxu0 %v1294
  %1307 = vmatprep.subr.mxu0 0.0
  %1308 = vmatpush1.msra.mxu0 %v1295
  %1309 = vmatprep.subr.mxu0 0.0
  %1310 = vmatpush1.msra.mxu0 %v1296
  %1311 = vmatprep.subr.mxu0 0.0
  %1312 = vmatpush1.msra.mxu0 0.0
  %1313 = vmatprep.subr.mxu0 0.0
  %1314 = vmatpush1.msra.mxu0 0.0
  %1315 = vmatprep.subr.mxu0 0.0
  %1316 = vmatpush1.msra.mxu0 0.0
  %1317 = vmatprep.subr.mxu0 0.0
  %1318 = vmatpush1.msra.mxu0 0.0
  %1319 = vmatprep.subr.mxu0 0.0
  %1320 = vmatpush1.msra.mxu0 0.0
  %1321 = vmatprep.subr.mxu0 0.0
  %1322 = vmatpush1.msra.mxu0 0.0
  %1323 = vmatprep.subr.mxu0 0.0
  %1324 = vmatpush1.msra.mxu0 0.0
  %1325 = vmatprep.subr.mxu0 0.0
  %1326 = vmatpush1.msra.mxu0 0.0
  %1327 = vmatprep.subr.mxu0 0.0
  %1328 = vmatpush1.msra.mxu0 0.0
  %1329 = vmatprep.subr.mxu0 0.0
  %1330 = vmatpush1.msra.mxu0 0.0
  %1331 = vmatprep.subr.mxu0 0.0
  %1332 = vmatpush1.msra.mxu0 0.0
  %1333 = vmatprep.subr.mxu0 0.0
  %1334 = vmatpush1.msra.mxu0 0.0
  %1335 = vmatprep.subr.mxu0 0.0
  %1336 = vmatpush1.msra.mxu0 0.0
  %1337 = vmatprep.subr.mxu0 0.0
  %1338 = vmatpush1.msra.mxu0 0.0
  %1339 = vmatprep.subr.mxu0 0.0
  %1340 = vmatpush1.msra.mxu0 0.0
  %1341 = vmatprep.subr.mxu0 0.0
  %1342 = vmatpush1.msra.mxu0 0.0
  %1343 = vmatprep.subr.mxu0 0.0
  %1344 = vmatpush1.msra.mxu0 0.0
  %1345 = vmatprep.subr.mxu0 0.0
  %1346 = vmatpush1.msra.mxu0 0.0
  %1347 = vmatprep.subr.mxu0 0.0
  %1348 = vmatpush1.msra.mxu0 0.0
  %1349 = vmatprep.subr.mxu0 0.0
  %1350 = vmatpush1.msra.mxu0 0.0
  %1351 = vmatprep.subr.mxu0 0.0
  %1352 = vmatpush1.msra.mxu0 0.0
  %1353 = vmatprep.subr.mxu0 0.0
  %1354 = vmatpush1.msra.mxu0 0.0
  %1355 = vmatprep.subr.mxu0 0.0
  %1356 = vmatpush1.msra.mxu0 0.0
  %1357 = vmatprep.subr.mxu0 0.0
  %1358 = vmatpush1.msra.mxu0 0.0
  %1359 = vmatprep.subr.mxu0 0.0
  %1360 = vmatpush1.msra.mxu0 0.0
  %1361 = vmatprep.subr.mxu0 0.0
  %1362 = vmatpush1.msra.mxu0 0.0
  %1363 = vmatprep.subr.mxu0 0.0
  %1364 = vmatpush1.msra.mxu0 0.0
  %1365 = vmatprep.subr.mxu0 0.0
  %1366 = vmatpush1.msra.mxu0 0.0
  %1367 = vmatprep.mubr.f32.mxu0 0.0
  %1368 = vmatmul.mubr.f32.gmra.mrb[0].mxu0 %v1298
  %v1369 = vpop.f32.mrb[0].mxu0
  %v1370 = vadd.f32 0.0, %v1369
  %v1371 = vpop.f32.mrb[0].mxu0
  %1372 = vmatprep.mubr.f32.mxu0 0.0
  %1373 = vmatmul.mubr.f32.gmra.mrb[0].mxu0 %v1301
  %v1374 = vpop.f32.mrb[0].mxu0
  %v1375 = vadd.f32 0.0, %v1374
  %v1376 = vpop.f32.mrb[0].mxu0
  %1377 = vdwg.mxu0
  %v1378 = vsub.f32 %v1291, %v1370
  %v1379 = vsub.f32 %v1292, %v1375
  %v1380 = vmul.f32 %v1378, %v1378
  %v1381 = vmul.f32 %v1379, %v1379
  %v1383 = vsel %vm52, %v1380, 0
  %v1386 = vsel %vm52, %v1381, 0
  %1388 = vmatprep.subr.mxu0 0.0
  %1389 = vmatpush1.msra.mxu0 %v1293
  %1390 = vmatprep.subr.mxu0 0.0
  %1391 = vmatpush1.msra.mxu0 %v1294
  %1392 = vmatprep.subr.mxu0 0.0
  %1393 = vmatpush1.msra.mxu0 %v1295
  %1394 = vmatprep.subr.mxu0 0.0
  %1395 = vmatpush1.msra.mxu0 %v1296
  %1396 = vmatprep.subr.mxu0 0.0
  %1397 = vmatpush1.msra.mxu0 0.0
  %1398 = vmatprep.subr.mxu0 0.0
  %1399 = vmatpush1.msra.mxu0 0.0
  %1400 = vmatprep.subr.mxu0 0.0
  %1401 = vmatpush1.msra.mxu0 0.0
  %1402 = vmatprep.subr.mxu0 0.0
  %1403 = vmatpush1.msra.mxu0 0.0
  %1404 = vmatprep.subr.mxu0 0.0
  %1405 = vmatpush1.msra.mxu0 0.0
  %1406 = vmatprep.subr.mxu0 0.0
  %1407 = vmatpush1.msra.mxu0 0.0
  %1408 = vmatprep.subr.mxu0 0.0
  %1409 = vmatpush1.msra.mxu0 0.0
  %1410 = vmatprep.subr.mxu0 0.0
  %1411 = vmatpush1.msra.mxu0 0.0
  %1412 = vmatprep.subr.mxu0 0.0
  %1413 = vmatpush1.msra.mxu0 0.0
  %1414 = vmatprep.subr.mxu0 0.0
  %1415 = vmatpush1.msra.mxu0 0.0
  %1416 = vmatprep.subr.mxu0 0.0
  %1417 = vmatpush1.msra.mxu0 0.0
  %1418 = vmatprep.subr.mxu0 0.0
  %1419 = vmatpush1.msra.mxu0 0.0
  %1420 = vmatprep.subr.mxu0 0.0
  %1421 = vmatpush1.msra.mxu0 0.0
  %1422 = vmatprep.subr.mxu0 0.0
  %1423 = vmatpush1.msra.mxu0 0.0
  %1424 = vmatprep.subr.mxu0 0.0
  %1425 = vmatpush1.msra.mxu0 0.0
  %1426 = vmatprep.subr.mxu0 0.0
  %1427 = vmatpush1.msra.mxu0 0.0
  %1428 = vmatprep.subr.mxu0 0.0
  %1429 = vmatpush1.msra.mxu0 0.0
  %1430 = vmatprep.subr.mxu0 0.0
  %1431 = vmatpush1.msra.mxu0 0.0
  %1432 = vmatprep.subr.mxu0 0.0
  %1433 = vmatpush1.msra.mxu0 0.0
  %1434 = vmatprep.subr.mxu0 0.0
  %1435 = vmatpush1.msra.mxu0 0.0
  %1436 = vmatprep.subr.mxu0 0.0
  %1437 = vmatpush1.msra.mxu0 0.0
  %1438 = vmatprep.subr.mxu0 0.0
  %1439 = vmatpush1.msra.mxu0 0.0
  %1440 = vmatprep.subr.mxu0 0.0
  %1441 = vmatpush1.msra.mxu0 0.0
  %1442 = vmatprep.subr.mxu0 0.0
  %1443 = vmatpush1.msra.mxu0 0.0
  %1444 = vmatprep.subr.mxu0 0.0
  %1445 = vmatpush1.msra.mxu0 0.0
  %1446 = vmatprep.subr.mxu0 0.0
  %1447 = vmatpush1.msra.mxu0 0.0
  %1448 = vmatprep.subr.mxu0 0.0
  %1449 = vmatpush1.msra.mxu0 0.0
  %1450 = vmatprep.subr.mxu0 0.0
  %1451 = vmatpush1.msra.mxu0 0.0
  %1452 = vmatprep.mubr.f32.mxu0 0.0
  %1453 = vmatmul.mubr.f32.gmra.mrb[0].mxu0 %v1383
  %v1454 = vpop.f32.mrb[0].mxu0
  %v1455 = vadd.f32 1e-05, %v1454
  %v1456 = vpop.f32.mrb[0].mxu0
  %1457 = vmatprep.mubr.f32.mxu0 0.0
  %1458 = vmatmul.mubr.f32.gmra.mrb[0].mxu0 %v1386
  %v1459 = vpop.f32.mrb[0].mxu0
  %v1460 = vadd.f32 1e-05, %v1459
  %v1461 = vpop.f32.mrb[0].mxu0
  %1462 = vdwg.mxu0
  %v1463 = vrsqrt.pop %v1455
  %v1464 = vrsqrt.pop %v1460
  %v1465 = vmul.f32 %v1378, %v1463
  %v1466 = vmul.f32 %v1379, %v1464
  %v1467 = vld [vmem:[%s7] sm:$0x1]
  %v1469 = vlaneseq
  %v1470 = vshrl.u32 %v1469, 7
  %v1471 = vsub.s32 0, %v1470
  %v1472 = vrot.slane %v1467, %v1471
  %v1474 = vmul.f32 %v1465, %v1472
  %v1475 = vmul.f32 %v1466, %v1472
  %v1476 = vld [vmem:[%s8] sm:$0x1]
  %v1478 = vlaneseq
  %v1479 = vshrl.u32 %v1478, 7
  %v1480 = vsub.s32 0, %v1479
  %v1481 = vrot.slane %v1476, %v1480
  %v1483 = vadd.f32 %v1474, %v1481
  %v1484 = vadd.f32 %v1475, %v1481
  %v1485 = vadd.f32 %v1483, %v50
  %v1486 = vadd.f32 %v1484, %v51
  %v1487 = vsel %vm52, %v1485, 0.0
  %1488 = vadd.xlane.f32.xlu0 %v1487
  %v1489 = vpop.xlane.xlu0 %1488
  %v1490 = vsel %vm52, %v1486, 0.0
  %1491 = vadd.xlane.f32.xlu0 %v1490
  %v1492 = vpop.xlane.xlu0 %1491
  %v1493 = vmul.f32 %v1489, %v59
  %v1494 = vmul.f32 %v1492, %v59
  %v1495 = vsub.f32 %v1485, %v1493
  %v1496 = vsub.f32 %v1486, %v1494
  %v1497 = vmul.f32 %v1495, %v1495
  %v1498 = vmul.f32 %v1496, %v1496
  %v1499 = vsel %vm52, %v1497, 0.0
  %1500 = vadd.xlane.f32.xlu0 %v1499
  %v1501 = vpop.xlane.xlu0 %1500
  %v1502 = vsel %vm52, %v1498, 0.0
  %1503 = vadd.xlane.f32.xlu0 %v1502
  %v1504 = vpop.xlane.xlu0 %1503
  %v1505 = vmul.f32 %v1501, %v59
  %v1506 = vmul.f32 %v1504, %v59
  %v1507 = vadd.f32 %v1505, 1e-05
  %v1508 = vadd.f32 %v1506, 1e-05
  %v1509 = vrsqrt.pop %v1507
  %v1510 = vrsqrt.pop %v1508
  %v1511 = vmul.f32 %v1495, %v1509
  %v1512 = vmul.f32 %v1496, %v1510
  %v1513 = vld [vmem:[%s9] sm:$0x1]
  %v1515 = vlaneseq
  %v1516 = vshrl.u32 %v1515, 7
  %v1517 = vsub.s32 0, %v1516
  %v1518 = vrot.slane %v1513, %v1517
  %v1520 = vmul.f32 %v1511, %v1518
  %v1521 = vmul.f32 %v1512, %v1518
  %v1522 = vld [vmem:[%s10] sm:$0x1]
  %v1524 = vlaneseq
  %v1525 = vshrl.u32 %v1524, 7
  %v1526 = vsub.s32 0, %v1525
  %v1527 = vrot.slane %v1522, %v1526
  %v1529 = vadd.f32 %v1520, %v1527
  %v1530 = vadd.f32 %v1521, %v1527
  %v1531 = vld [vmem:[%s11] sm:$0xff]
  %v1532 = vld [vmem:[%s11 + $0x8] sm:$0xff]
  %v1533 = vld [vmem:[%s11 + $0x10] sm:$0xff]
  %v1534 = vld [vmem:[%s11 + $0x18] sm:$0xff]
  %v1535 = vld [vmem:[%s12] sm:$0x1]
  %v1537 = vlaneseq
  %v1538 = vshrl.u32 %v1537, 7
  %v1539 = vsub.s32 0, %v1538
  %v1540 = vrot.slane %v1535, %v1539
  %v1543 = vsel %vm52, %v1529, 0
  %v1546 = vsel %vm52, %v1530, 0
  %1548 = vmatprep.subr.mxu0 0.0
  %1549 = vmatpush1.msra.mxu0 %v1531
  %1550 = vmatprep.subr.mxu0 0.0
  %1551 = vmatpush1.msra.mxu0 %v1532
  %1552 = vmatprep.subr.mxu0 0.0
  %1553 = vmatpush1.msra.mxu0 %v1533
  %1554 = vmatprep.subr.mxu0 0.0
  %1555 = vmatpush1.msra.mxu0 %v1534
  %1556 = vmatprep.subr.mxu0 0.0
  %1557 = vmatpush1.msra.mxu0 0.0
  %1558 = vmatprep.subr.mxu0 0.0
  %1559 = vmatpush1.msra.mxu0 0.0
  %1560 = vmatprep.subr.mxu0 0.0
  %1561 = vmatpush1.msra.mxu0 0.0
  %1562 = vmatprep.subr.mxu0 0.0
  %1563 = vmatpush1.msra.mxu0 0.0
  %1564 = vmatprep.subr.mxu0 0.0
  %1565 = vmatpush1.msra.mxu0 0.0
  %1566 = vmatprep.subr.mxu0 0.0
  %1567 = vmatpush1.msra.mxu0 0.0
  %1568 = vmatprep.subr.mxu0 0.0
  %1569 = vmatpush1.msra.mxu0 0.0
  %1570 = vmatprep.subr.mxu0 0.0
  %1571 = vmatpush1.msra.mxu0 0.0
  %1572 = vmatprep.subr.mxu0 0.0
  %1573 = vmatpush1.msra.mxu0 0.0
  %1574 = vmatprep.subr.mxu0 0.0
  %1575 = vmatpush1.msra.mxu0 0.0
  %1576 = vmatprep.subr.mxu0 0.0
  %1577 = vmatpush1.msra.mxu0 0.0
  %1578 = vmatprep.subr.mxu0 0.0
  %1579 = vmatpush1.msra.mxu0 0.0
  %1580 = vmatprep.subr.mxu0 0.0
  %1581 = vmatpush1.msra.mxu0 0.0
  %1582 = vmatprep.subr.mxu0 0.0
  %1583 = vmatpush1.msra.mxu0 0.0
  %1584 = vmatprep.subr.mxu0 0.0
  %1585 = vmatpush1.msra.mxu0 0.0
  %1586 = vmatprep.subr.mxu0 0.0
  %1587 = vmatpush1.msra.mxu0 0.0
  %1588 = vmatprep.subr.mxu0 0.0
  %1589 = vmatpush1.msra.mxu0 0.0
  %1590 = vmatprep.subr.mxu0 0.0
  %1591 = vmatpush1.msra.mxu0 0.0
  %1592 = vmatprep.subr.mxu0 0.0
  %1593 = vmatpush1.msra.mxu0 0.0
  %1594 = vmatprep.subr.mxu0 0.0
  %1595 = vmatpush1.msra.mxu0 0.0
  %1596 = vmatprep.subr.mxu0 0.0
  %1597 = vmatpush1.msra.mxu0 0.0
  %1598 = vmatprep.subr.mxu0 0.0
  %1599 = vmatpush1.msra.mxu0 0.0
  %1600 = vmatprep.subr.mxu0 0.0
  %1601 = vmatpush1.msra.mxu0 0.0
  %1602 = vmatprep.subr.mxu0 0.0
  %1603 = vmatpush1.msra.mxu0 0.0
  %1604 = vmatprep.subr.mxu0 0.0
  %1605 = vmatpush1.msra.mxu0 0.0
  %1606 = vmatprep.subr.mxu0 0.0
  %1607 = vmatpush1.msra.mxu0 0.0
  %1608 = vmatprep.subr.mxu0 0.0
  %1609 = vmatpush1.msra.mxu0 0.0
  %1610 = vmatprep.subr.mxu0 0.0
  %1611 = vmatpush1.msra.mxu0 0.0
  %1612 = vmatprep.mubr.f32.mxu0 0.0
  %1613 = vmatmul.mubr.f32.gmra.mrb[0].mxu0 %v1543
  %v1614 = vpop.f32.mrb[0].mxu0
  %v1615 = vadd.f32 %v1540, %v1614
  %v1616 = vpop.f32.mrb[0].mxu0
  %1617 = vmatprep.mubr.f32.mxu0 0.0
  %1618 = vmatmul.mubr.f32.gmra.mrb[0].mxu0 %v1546
  %v1619 = vpop.f32.mrb[0].mxu0
  %v1620 = vadd.f32 %v1540, %v1619
  %v1621 = vpop.f32.mrb[0].mxu0
  %1622 = vdwg.mxu0
  %v1623 = vmul.f32 %v1615, 0.5
  %v1624 = vmul.f32 %v1620, 0.5
  %v1625 = vmul.f32 %v1615, 0.70710677
  %v1626 = vmul.f32 %v1620, 0.70710677
  %v1627 = verf.f32.pop %v1625
  %v1628 = verf.f32.pop %v1626
  %v1629 = vadd.f32 %v1627, 1.0
  %v1630 = vadd.f32 %v1628, 1.0
  %v1631 = vmul.f32 %v1623, %v1629
  %v1632 = vmul.f32 %v1624, %v1630
  %1635 = vrot.lane.b32.xlu0 %v1631, 64
  %v1636 = vpop.permute.xlu0 %1635
  %1637 = vrot.lane.b32.xlu0 %v1632, 64
  %v1638 = vpop.permute.xlu0 %1637
  %v1641 = vmul.f32 %v1615, %v1636
  %v1642 = vmul.f32 %v1620, %v1638
  %v1643 = vld [vmem:[%s13] sm:$0xff]
  %v1644 = vld [vmem:[%s13 + $0x8] sm:$0xff]
  %v1645 = vld [vmem:[%s13 + $0x10] sm:$0xff]
  %v1646 = vld [vmem:[%s13 + $0x18] sm:$0xff]
  %v1647 = vld [vmem:[%s13 + $0x20] sm:$0xff]
  %v1648 = vld [vmem:[%s13 + $0x28] sm:$0xff]
  %v1649 = vld [vmem:[%s13 + $0x30] sm:$0xff]
  %v1650 = vld [vmem:[%s13 + $0x38] sm:$0xff]
  %v1651 = vld [vmem:[%s14] sm:$0x1]
  %v1653 = vlaneseq
  %v1654 = vshrl.u32 %v1653, 7
  %v1655 = vsub.s32 0, %v1654
  %v1656 = vrot.slane %v1651, %v1655
  %vm1658 = vcmask 523264
  %v1660 = vsel %vm1658, %v1641, 0
  %v1663 = vsel %vm1658, %v1642, 0
  %1665 = vmatprep.subr.mxu0 0.0
  %1666 = vmatpush1.msra.mxu0 %v1643
  %1667 = vmatprep.subr.mxu0 0.0
  %1668 = vmatpush1.msra.mxu0 %v1644
  %1669 = vmatprep.subr.mxu0 0.0
  %1670 = vmatpush1.msra.mxu0 %v1645
  %1671 = vmatprep.subr.mxu0 0.0
  %1672 = vmatpush1.msra.mxu0 %v1646
  %1673 = vmatprep.subr.mxu0 0.0
  %1674 = vmatpush1.msra.mxu0 %v1647
  %1675 = vmatprep.subr.mxu0 0.0
  %1676 = vmatpush1.msra.mxu0 %v1648
  %1677 = vmatprep.subr.mxu0 0.0
  %1678 = vmatpush1.msra.mxu0 %v1649
  %1679 = vmatprep.subr.mxu0 0.0
  %1680 = vmatpush1.msra.mxu0 %v1650
  %1681 = vmatprep.subr.mxu0 0.0
  %1682 = vmatpush1.msra.mxu0 0.0
  %1683 = vmatprep.subr.mxu0 0.0
  %1684 = vmatpush1.msra.mxu0 0.0
  %1685 = vmatprep.subr.mxu0 0.0
  %1686 = vmatpush1.msra.mxu0 0.0
  %1687 = vmatprep.subr.mxu0 0.0
  %1688 = vmatpush1.msra.mxu0 0.0
  %1689 = vmatprep.subr.mxu0 0.0
  %1690 = vmatpush1.msra.mxu0 0.0
  %1691 = vmatprep.subr.mxu0 0.0
  %1692 = vmatpush1.msra.mxu0 0.0
  %1693 = vmatprep.subr.mxu0 0.0
  %1694 = vmatpush1.msra.mxu0 0.0
  %1695 = vmatprep.subr.mxu0 0.0
  %1696 = vmatpush1.msra.mxu0 0.0
  %1697 = vmatprep.subr.mxu0 0.0
  %1698 = vmatpush1.msra.mxu0 0.0
  %1699 = vmatprep.subr.mxu0 0.0
  %1700 = vmatpush1.msra.mxu0 0.0
  %1701 = vmatprep.subr.mxu0 0.0
  %1702 = vmatpush1.msra.mxu0 0.0
  %1703 = vmatprep.subr.mxu0 0.0
  %1704 = vmatpush1.msra.mxu0 0.0
  %1705 = vmatprep.subr.mxu0 0.0
  %1706 = vmatpush1.msra.mxu0 0.0
  %1707 = vmatprep.subr.mxu0 0.0
  %1708 = vmatpush1.msra.mxu0 0.0
  %1709 = vmatprep.subr.mxu0 0.0
  %1710 = vmatpush1.msra.mxu0 0.0
  %1711 = vmatprep.subr.mxu0 0.0
  %1712 = vmatpush1.msra.mxu0 0.0
  %1713 = vmatprep.subr.mxu0 0.0
  %1714 = vmatpush1.msra.mxu0 0.0
  %1715 = vmatprep.subr.mxu0 0.0
  %1716 = vmatpush1.msra.mxu0 0.0
  %1717 = vmatprep.subr.mxu0 0.0
  %1718 = vmatpush1.msra.mxu0 0.0
  %1719 = vmatprep.subr.mxu0 0.0
  %1720 = vmatpush1.msra.mxu0 0.0
  %1721 = vmatprep.subr.mxu0 0.0
  %1722 = vmatpush1.msra.mxu0 0.0
  %1723 = vmatprep.subr.mxu0 0.0
  %1724 = vmatpush1.msra.mxu0 0.0
  %1725 = vmatprep.subr.mxu0 0.0
  %1726 = vmatpush1.msra.mxu0 0.0
  %1727 = vmatprep.subr.mxu0 0.0
  %1728 = vmatpush1.msra.mxu0 0.0
  %1729 = vmatprep.mubr.f32.mxu0 0.0
  %1730 = vmatmul.mubr.f32.gmra.mrb[0].mxu0 %v1660
  %v1731 = vpop.f32.mrb[0].mxu0
  %v1732 = vadd.f32 %v1656, %v1731
  %v1733 = vpop.f32.mrb[0].mxu0
  %1734 = vmatprep.mubr.f32.mxu0 0.0
  %1735 = vmatmul.mubr.f32.gmra.mrb[0].mxu0 %v1663
  %v1736 = vpop.f32.mrb[0].mxu0
  %v1737 = vadd.f32 %v1656, %v1736
  %v1738 = vpop.f32.mrb[0].mxu0
  %1739 = vdwg.mxu0
  %v1740 = vadd.f32 %v1732, %v1485
  %v1741 = vadd.f32 %v1737, %v1486
  %1742 = vst.msk [vmem:[%s15] sm:$0xff] %vm52, %v1740
  %1743 = vst.msk [vmem:[%s15 + $0x8] sm:$0xff] %vm52, %v1741
  // Predicated region
  $region62: #{slstm_block_forward.1} parent=0 // pred_check
    _
  $region63: #{slstm_block_forward.1} parent=0 // pred_check_branch
    %1745 = sbr.rel (0) target = $region65
  $region64: #{slstm_block_forward.1} parent=0 // pred_region
    _
  $region65: #{slstm_block_forward.1} parent=0 // pred_fallthru
    _
  // Predicated region
  $region66: #{slstm_block_forward.1} parent=0 // pred_check
    _
  $region67: #{slstm_block_forward.1} parent=0 // pred_check_branch
    %1747 = sbr.rel (0) target = $region69
  $region68: #{slstm_block_forward.1} parent=0 // pred_region
    _
  $region69: #{slstm_block_forward.1} parent=0 // pred_fallthru
    _

</llo_original>
